<compile_context>
chip_gen: v7x
topology: tpu7x:2x2x1
jax: 0.10.0
libtpu: 0.0.40
codegen_flags: <defaults>
</compile_context>

<pallas_src>
import numpy as np

import jax
import jax.numpy as jnp
from jax.experimental import pallas as pl
from jax.experimental.pallas import tpu as pltpu

_VMEM_LIMIT = 32 * 1024 * 1024   # explicit scoped-VMEM budget (safe on v5e/v6e/v7x)


# ----------------------------------------------------------------------------
# Parameter preprocessing (one-time, outside the forward path)
# ----------------------------------------------------------------------------
def _prep_conv(w_oihw, b, hin, win):
    """Build pool-fused banded conv weights for the (H, W*C) slab layout.

    Returns (wb, sel, brow, hp, wp):
      wb   (kh, win*cin, 2*wp*cout) bf16 : tap-row i weights.  Multiplying
           input rows [i, i+ho) by wb[i] and summing over i gives, per conv
           output row, the conv outputs at even wo=2*wp in columns
           [0:wp*cout] and odd wo=2*wp+1 in columns [wp*cout:] (the two 2x2
           pool column candidates).
      sel  (2*hp, ho) f32 : 0/1 selector; rows [0:hp] pick even conv rows,
           rows [hp:] pick odd conv rows (the two 2x2 pool row candidates).
      brow (1, wp*cout) f32 : bias tiled over wp (output column = wp*cout+co).

    Floor-mode 2x2/stride-2 pooling (odd trailing rows/cols dropped) matches
    PyTorch MaxPool2d(2, 2) defaults.
    """
    w = np.asarray(w_oihw, dtype=np.float32)          # PyTorch OIHW
    bv = np.asarray(b, dtype=np.float32)
    cout, cin, kh, kw = w.shape
    ho, wo = hin - kh + 1, win - kw + 1
    hp, wp = ho // 2, wo // 2
    half = wp * cout
    wb = np.zeros((kh, win * cin, 2 * half), np.float32)
    for i in range(kh):
        for j in range(kw):
            blk = w[:, :, i, j].T                      # (cin, cout)
            for dw in range(2):
                for wpix in range(wp):
                    r0 = (2 * wpix + dw + j) * cin
                    c0 = dw * half + wpix * cout
                    wb[i, r0:r0 + cin, c0:c0 + cout] = blk
    sel = np.zeros((2 * hp, ho), np.float32)
    sel[np.arange(hp), 2 * np.arange(hp)] = 1.0
    sel[hp + np.arange(hp), 2 * np.arange(hp) + 1] = 1.0
    brow = np.tile(bv, wp).reshape(1, half)
    return (jnp.asarray(wb, dtype=jnp.bfloat16),
            jnp.asarray(sel, dtype=jnp.float32),
            jnp.asarray(brow, dtype=jnp.float32),
            hp, wp)


def preprocess_params(p, hin=32, win=32):
    """One-time layout/dtype prep, hoisted out of the forward path."""
    prep = {}
    h, w = hin, win
    for idx in (1, 2, 3):
        wb, sel, brow, h, w = _prep_conv(p[f"conv{idx}_w"], p[f"conv{idx}_b"], h, w)
        prep[f"conv{idx}_w"] = wb
        prep[f"conv{idx}_s"] = sel
        prep[f"conv{idx}_b"] = brow
    # The PyTorch module hard-codes fc1 fan-in = conv3_out * 1 * 1, so the
    # input spatial size must pool down to exactly 1x1 (true for 3x32x32).
    assert (h, w) == (1, 1), "input spatial size must pool down to 1x1 before fc1"
    for idx in (1, 2, 3):
        prep[f"fc{idx}_w"] = jnp.asarray(p[f"fc{idx}_w"], jnp.bfloat16)
        prep[f"fc{idx}_b"] = jnp.asarray(p[f"fc{idx}_b"], jnp.float32).reshape(1, -1)
    return prep


# ----------------------------------------------------------------------------
# Fused forward pass (single pallas_call)
# ----------------------------------------------------------------------------
def driving_net_forward(prep, x_nchw):
    """Fully fused DrivingNet forward.  x_nchw: (B, 3, 32, 32) f32."""
    B, C, H, W = x_nchw.shape
    # One-time layout glue: NCHW -> NHWC -> (B, H, W*C) slab, bf16 MXU operand.
    x = jnp.transpose(x_nchw, (0, 2, 3, 1)).reshape(B, H, W * C).astype(jnp.bfloat16)

    w1, s1, b1 = prep["conv1_w"], prep["conv1_s"], prep["conv1_b"]
    w2, s2, b2 = prep["conv2_w"], prep["conv2_s"], prep["conv2_b"]
    w3, s3, b3 = prep["conv3_w"], prep["conv3_s"], prep["conv3_b"]
    fw1, fb1 = prep["fc1_w"], prep["fc1_b"]
    fw2, fb2 = prep["fc2_w"], prep["fc2_b"]
    fw3, fb3 = prep["fc3_w"], prep["fc3_b"]

    # Static per-layer geometry (kh, ho, hp, wp*cout), recovered from shapes.
    geoms = []
    for wb, sb in ((w1, s1), (w2, s2), (w3, s3)):
        geoms.append((wb.shape[0], sb.shape[1], sb.shape[0] // 2, wb.shape[2] // 2))
    assert w1.shape[1] == W * C                                   # conv1 reads raw slab
    assert w2.shape[1] == geoms[0][3] and w3.shape[1] == geoms[1][3]
    assert geoms[2][2] == 1 and geoms[2][3] == fw1.shape[0]       # 1x1 spatial -> fc1 fan-in
    n_out = fw3.shape[1]

    def kernel(x_ref, w1r, s1r, b1r, w2r, s2r, b2r, w3r, s3r, b3r,
               fw1r, fb1r, fw2r, fb2r, fw3r, fb3r, o_ref):
        def conv_pool(h_in, w_r, s_r, b_r, geom):
            kh, ho, hp, half = geom
            # Tap-row accumulation: kh small bf16 matmuls, f32 accumulation.
            acc = jnp.dot(h_in[0:ho, :], w_r[0], preferred_element_type=jnp.float32)
            for i in range(1, kh):
                acc = acc + jnp.dot(h_in[i:i + ho, :], w_r[i],
                                    preferred_element_type=jnp.float32)
            # 2x2 max pool: W-pool via the even/odd column halves baked into the
            # banded weights; H-pool via the 0/1 row-selector matmul.
            colmax = jnp.maximum(acc[:, :half], acc[:, half:])               # (ho, half)
            rows = jnp.dot(s_r[...], colmax, preferred_element_type=jnp.float32)
            pooled = jnp.maximum(rows[0:hp, :], rows[hp:2 * hp, :])          # (hp, half)
            # Bias + ReLU once, after the 4-way max (monotone, shared bias).
            return jnp.maximum(pooled + b_r[...], 0.0).astype(jnp.bfloat16)

        h = x_ref[0]                                   # (H, W*C) bf16 image slab
        h = conv_pool(h, w1r, s1r, b1r, geoms[0])      # (14, 14*c1)
        h = conv_pool(h, w2r, s2r, b2r, geoms[1])      # (5,  5*c2)
        h = conv_pool(h, w3r, s3r, b3r, geoms[2])      # (1,  c3) == flattened features
        z = jnp.dot(h, fw1r[...], preferred_element_type=jnp.float32)
        z = jnp.maximum(z + fb1r[...], 0.0).astype(jnp.bfloat16)
        z = jnp.dot(z, fw2r[...], preferred_element_type=jnp.float32)
        z = jnp.maximum(z + fb2r[...], 0.0).astype(jnp.bfloat16)
        z = jnp.dot(z, fw3r[...], preferred_element_type=jnp.float32) + fb3r[...]
        o_ref[0] = z.astype(o_ref.dtype)

    def resident(a):
        nd = a.ndim
        return pl.BlockSpec(a.shape, lambda b: (0,) * nd)   # weights: fetched once

    weights = (w1, s1, b1, w2, s2, b2, w3, s3, b3, fw1, fb1, fw2, fb2, fw3, fb3)
    out = pl.pallas_call(
        kernel,
        out_shape=jax.ShapeDtypeStruct((B, 1, n_out), jnp.float32),
        grid=(B,),
        in_specs=[pl.BlockSpec((1, H, W * C), lambda b: (b, 0, 0))]
                 + [resident(a) for a in weights],
        out_specs=pl.BlockSpec((1, 1, n_out), lambda b: (b, 0, 0)),
        compiler_params=pltpu.CompilerParams(
            dimension_semantics=("parallel",),       # batch steps -> both v7x TCs
            vmem_limit_bytes=_VMEM_LIMIT),
    )(x, *weights)
    return out.reshape(B, n_out)


# ----------------------------------------------------------------------------
# Parameters (PyTorch-style init / layouts)
# ----------------------------------------------------------------------------
def init_params(key, conv1_out, conv2_out, conv3_out, fc1_out, fc2_out):
    """PyTorch-style uniform(+-1/sqrt(fan_in)) init, f32, PyTorch layouts."""
    def uinit(k, shape, fan_in):
        bound = 1.0 / float(np.sqrt(fan_in))
        return jax.random.uniform(k, shape, jnp.float32, -bound, bound)

    keys = jax.random.split(key, 12)
    p = {}
    p["conv1_w"] = uinit(keys[0], (conv1_out, 3, 5, 5), 3 * 5 * 5)
    p["conv1_b"] = uinit(keys[1], (conv1_out,), 3 * 5 * 5)
    p["conv2_w"] = uinit(keys[2], (conv2_out, conv1_out, 5, 5), conv1_out * 5 * 5)
    p["conv2_b"] = uinit(keys[3], (conv2_out,), conv1_out * 5 * 5)
    p["conv3_w"] = uinit(keys[4], (conv3_out, conv2_out, 3, 3), conv2_out * 3 * 3)
    p["conv3_b"] = uinit(keys[5], (conv3_out,), conv2_out * 3 * 3)
    p["fc1_w"] = uinit(keys[6], (conv3_out, fc1_out), conv3_out)   # (in, out)
    p["fc1_b"] = uinit(keys[7], (fc1_out,), conv3_out)
    p["fc2_w"] = uinit(keys[8], (fc1_out, fc2_out), fc1_out)
    p["fc2_b"] = uinit(keys[9], (fc2_out,), fc1_out)
    p["fc3_w"] = uinit(keys[10], (fc2_out, 2), fc2_out)
    p["fc3_b"] = uinit(keys[11], (2,), fc2_out)
    return p


# ----------------------------------------------------------------------------
# Pure-JAX f32 reference (sanity check)
# ----------------------------------------------------------------------------
def reference_forward(params, x_nchw):
    x = jnp.transpose(x_nchw, (0, 2, 3, 1))

    def conv(x, w_oihw, b):
        w = jnp.transpose(w_oihw, (2, 3, 1, 0))  # HWIO
        y = jax.lax.conv_general_dilated(
            x, w, (1, 1), "VALID",
            dimension_numbers=("NHWC", "HWIO", "NHWC"))
        return jax.nn.relu(y + b)

    def pool(x):
        return jax.lax.reduce_window(
            x, -jnp.inf, jax.lax.max, (1, 2, 2, 1), (1, 2, 2, 1), "VALID")

    x = pool(conv(x, params["conv1_w"], params["conv1_b"]))
    x = pool(conv(x, params["conv2_w"], params["conv2_b"]))
    x = pool(conv(x, params["conv3_w"], params["conv3_b"]))
    x = x.reshape(x.shape[0], -1)
    x = jax.nn.relu(x @ params["fc1_w"] + params["fc1_b"])
    x = jax.nn.relu(x @ params["fc2_w"] + params["fc2_b"])
    return x @ params["fc3_w"] + params["fc3_b"]


if __name__ == "__main__":
    # Input must be 3x32x32 so conv3's output pools to 1x1 (matches fc1 fan-in).
    B = 2
    conv1_out, conv2_out, conv3_out = 8, 16, 32
    fc1_out, fc2_out = 32, 16

    key = jax.random.PRNGKey(0)
    k_in, k_params = jax.random.split(key)
    x = jax.random.normal(k_in, (B, 3, 32, 32), dtype=jnp.float32)
    params = init_params(k_params, conv1_out, conv2_out, conv3_out, fc1_out, fc2_out)
    prep = preprocess_params(params)          # one-time weight layout/dtype prep

    fwd = jax.jit(driving_net_forward)
    out = jax.block_until_ready(fwd(prep, x))
    assert out.shape == (B, 2), out.shape

    ref = jax.block_until_ready(reference_forward(params, x))
    # bf16 MXU operands vs. the f32 reference: ~1e-2-level differences expected.
    assert jnp.allclose(out, ref, rtol=5e-2, atol=5e-2), (out, ref)

    print("KERNEL_OK")
</pallas_src>

<mosaic_0001>
module attributes {stable_mosaic.version = 11 : i64} {
  func.func @kernel(%arg0: i32, %arg1: memref<1x32x96xbf16, #tpu.memory_space<vmem>>, %arg2: memref<5x96x224xbf16, #tpu.memory_space<vmem>>, %arg3: memref<28x28xf32, #tpu.memory_space<vmem>>, %arg4: memref<1x112xf32, #tpu.memory_space<vmem>>, %arg5: memref<5x112x160xbf16, #tpu.memory_space<vmem>>, %arg6: memref<10x10xf32, #tpu.memory_space<vmem>>, %arg7: memref<1x80xf32, #tpu.memory_space<vmem>>, %arg8: memref<3x80x64xbf16, #tpu.memory_space<vmem>>, %arg9: memref<2x3xf32, #tpu.memory_space<vmem>>, %arg10: memref<1x32xf32, #tpu.memory_space<vmem>>, %arg11: memref<32x32xbf16, #tpu.memory_space<vmem>>, %arg12: memref<1x32xf32, #tpu.memory_space<vmem>>, %arg13: memref<32x16xbf16, #tpu.memory_space<vmem>>, %arg14: memref<1x16xf32, #tpu.memory_space<vmem>>, %arg15: memref<16x2xbf16, #tpu.memory_space<vmem>>, %arg16: memref<1x2xf32, #tpu.memory_space<vmem>>, %arg17: memref<1x1x2xf32, #tpu.memory_space<vmem>>) attributes {dimension_semantics = [#tpu.dimension_semantics<parallel>], iteration_bounds = array<i64: 2>, scalar_prefetch = 0 : i64, scratch_operands = 0 : i64, tpu.core_type = #tpu.core_type<tc>, window_params = [{transform_indices = @transform_0, window_bounds = array<i64: 1, 32, 96>}, {pipeline_mode = #tpu.pipeline_mode<synchronous>, transform_indices = @transform_1, window_bounds = array<i64: 5, 96, 224>}, {pipeline_mode = #tpu.pipeline_mode<synchronous>, transform_indices = @transform_2, window_bounds = array<i64: 28, 28>}, {pipeline_mode = #tpu.pipeline_mode<synchronous>, transform_indices = @transform_3, window_bounds = array<i64: 1, 112>}, {pipeline_mode = #tpu.pipeline_mode<synchronous>, transform_indices = @transform_4, window_bounds = array<i64: 5, 112, 160>}, {pipeline_mode = #tpu.pipeline_mode<synchronous>, transform_indices = @transform_5, window_bounds = array<i64: 10, 10>}, {pipeline_mode = #tpu.pipeline_mode<synchronous>, transform_indices = @transform_6, window_bounds = array<i64: 1, 80>}, {pipeline_mode = #tpu.pipeline_mode<synchronous>, transform_indices = @transform_7, window_bounds = array<i64: 3, 80, 64>}, {pipeline_mode = #tpu.pipeline_mode<synchronous>, transform_indices = @transform_8, window_bounds = array<i64: 2, 3>}, {pipeline_mode = #tpu.pipeline_mode<synchronous>, transform_indices = @transform_9, window_bounds = array<i64: 1, 32>}, {pipeline_mode = #tpu.pipeline_mode<synchronous>, transform_indices = @transform_10, window_bounds = array<i64: 32, 32>}, {pipeline_mode = #tpu.pipeline_mode<synchronous>, transform_indices = @transform_11, window_bounds = array<i64: 1, 32>}, {pipeline_mode = #tpu.pipeline_mode<synchronous>, transform_indices = @transform_12, window_bounds = array<i64: 32, 16>}, {pipeline_mode = #tpu.pipeline_mode<synchronous>, transform_indices = @transform_13, window_bounds = array<i64: 1, 16>}, {pipeline_mode = #tpu.pipeline_mode<synchronous>, transform_indices = @transform_14, window_bounds = array<i64: 16, 2>}, {pipeline_mode = #tpu.pipeline_mode<synchronous>, transform_indices = @transform_15, window_bounds = array<i64: 1, 2>}, {transform_indices = @transform_16, window_bounds = array<i64: 1, 1, 2>}]} {
    %c0 = arith.constant 0 : index
    %c0_0 = arith.constant 0 : index
    %c0_1 = arith.constant 0 : index
    %0 = vector.load %arg1[%c0, %c0_0, %c0_1] : memref<1x32x96xbf16, #tpu.memory_space<vmem>>, vector<1x32x96xbf16>
    %1 = vector.shape_cast %0 : vector<1x32x96xbf16> to vector<32x96xbf16>
    %2 = vector.extract_strided_slice %1 {offsets = [0, 0], sizes = [28, 96], strides = [1, 1]} : vector<32x96xbf16> to vector<28x96xbf16>
    %c0_2 = arith.constant 0 : index
    %c0_3 = arith.constant 0 : index
    %c0_4 = arith.constant 0 : index
    %3 = vector.load %arg2[%c0_2, %c0_3, %c0_4] : memref<5x96x224xbf16, #tpu.memory_space<vmem>>, vector<1x96x224xbf16>
    %4 = vector.shape_cast %3 : vector<1x96x224xbf16> to vector<96x224xbf16>
    %cst = arith.constant dense<0.000000e+00> : vector<28x224xf32>
    %5 = tpu.matmul %2, %4, %cst {dimension_numbers = #tpu.dot_dimension_numbers<[1], [0], [0], [1], [0, 0, 1, 1], [], []>} : vector<28x96xbf16>, vector<96x224xbf16>, vector<28x224xf32> -> vector<28x224xf32>
    %6 = vector.extract_strided_slice %1 {offsets = [1, 0], sizes = [28, 96], strides = [1, 1]} : vector<32x96xbf16> to vector<28x96xbf16>
    %c1 = arith.constant 1 : index
    %c0_5 = arith.constant 0 : index
    %c0_6 = arith.constant 0 : index
    %7 = vector.load %arg2[%c1, %c0_5, %c0_6] : memref<5x96x224xbf16, #tpu.memory_space<vmem>>, vector<1x96x224xbf16>
    %8 = vector.shape_cast %7 : vector<1x96x224xbf16> to vector<96x224xbf16>
    %cst_7 = arith.constant dense<0.000000e+00> : vector<28x224xf32>
    %9 = tpu.matmul %6, %8, %cst_7 {dimension_numbers = #tpu.dot_dimension_numbers<[1], [0], [0], [1], [0, 0, 1, 1], [], []>} : vector<28x96xbf16>, vector<96x224xbf16>, vector<28x224xf32> -> vector<28x224xf32>
    %10 = arith.addf %5, %9 : vector<28x224xf32>
    %11 = vector.extract_strided_slice %1 {offsets = [2, 0], sizes = [28, 96], strides = [1, 1]} : vector<32x96xbf16> to vector<28x96xbf16>
    %c2 = arith.constant 2 : index
    %c0_8 = arith.constant 0 : index
    %c0_9 = arith.constant 0 : index
    %12 = vector.load %arg2[%c2, %c0_8, %c0_9] : memref<5x96x224xbf16, #tpu.memory_space<vmem>>, vector<1x96x224xbf16>
    %13 = vector.shape_cast %12 : vector<1x96x224xbf16> to vector<96x224xbf16>
    %cst_10 = arith.constant dense<0.000000e+00> : vector<28x224xf32>
    %14 = tpu.matmul %11, %13, %cst_10 {dimension_numbers = #tpu.dot_dimension_numbers<[1], [0], [0], [1], [0, 0, 1, 1], [], []>} : vector<28x96xbf16>, vector<96x224xbf16>, vector<28x224xf32> -> vector<28x224xf32>
    %15 = arith.addf %10, %14 : vector<28x224xf32>
    %16 = vector.extract_strided_slice %1 {offsets = [3, 0], sizes = [28, 96], strides = [1, 1]} : vector<32x96xbf16> to vector<28x96xbf16>
    %c3 = arith.constant 3 : index
    %c0_11 = arith.constant 0 : index
    %c0_12 = arith.constant 0 : index
    %17 = vector.load %arg2[%c3, %c0_11, %c0_12] : memref<5x96x224xbf16, #tpu.memory_space<vmem>>, vector<1x96x224xbf16>
    %18 = vector.shape_cast %17 : vector<1x96x224xbf16> to vector<96x224xbf16>
    %cst_13 = arith.constant dense<0.000000e+00> : vector<28x224xf32>
    %19 = tpu.matmul %16, %18, %cst_13 {dimension_numbers = #tpu.dot_dimension_numbers<[1], [0], [0], [1], [0, 0, 1, 1], [], []>} : vector<28x96xbf16>, vector<96x224xbf16>, vector<28x224xf32> -> vector<28x224xf32>
    %20 = arith.addf %15, %19 : vector<28x224xf32>
    %21 = vector.extract_strided_slice %1 {offsets = [4, 0], sizes = [28, 96], strides = [1, 1]} : vector<32x96xbf16> to vector<28x96xbf16>
    %c4 = arith.constant 4 : index
    %c0_14 = arith.constant 0 : index
    %c0_15 = arith.constant 0 : index
    %22 = vector.load %arg2[%c4, %c0_14, %c0_15] : memref<5x96x224xbf16, #tpu.memory_space<vmem>>, vector<1x96x224xbf16>
    %23 = vector.shape_cast %22 : vector<1x96x224xbf16> to vector<96x224xbf16>
    %cst_16 = arith.constant dense<0.000000e+00> : vector<28x224xf32>
    %24 = tpu.matmul %21, %23, %cst_16 {dimension_numbers = #tpu.dot_dimension_numbers<[1], [0], [0], [1], [0, 0, 1, 1], [], []>} : vector<28x96xbf16>, vector<96x224xbf16>, vector<28x224xf32> -> vector<28x224xf32>
    %25 = arith.addf %20, %24 : vector<28x224xf32>
    %26 = vector.extract_strided_slice %25 {offsets = [0, 0], sizes = [28, 112], strides = [1, 1]} : vector<28x224xf32> to vector<28x112xf32>
    %27 = vector.extract_strided_slice %25 {offsets = [0, 112], sizes = [28, 112], strides = [1, 1]} : vector<28x224xf32> to vector<28x112xf32>
    %28 = arith.maximumf %26, %27 : vector<28x112xf32>
    %c0_17 = arith.constant 0 : index
    %c0_18 = arith.constant 0 : index
    %29 = vector.load %arg3[%c0_17, %c0_18] : memref<28x28xf32, #tpu.memory_space<vmem>>, vector<28x28xf32>
    %cst_19 = arith.constant dense<0.000000e+00> : vector<28x112xf32>
    %30 = tpu.matmul %29, %28, %cst_19 {dimension_numbers = #tpu.dot_dimension_numbers<[1], [0], [0], [1], [0, 0, 1, 1], [], []>} : vector<28x28xf32>, vector<28x112xf32>, vector<28x112xf32> -> vector<28x112xf32>
    %31 = vector.extract_strided_slice %30 {offsets = [0, 0], sizes = [14, 112], strides = [1, 1]} : vector<28x112xf32> to vector<14x112xf32>
    %32 = vector.extract_strided_slice %30 {offsets = [14, 0], sizes = [14, 112], strides = [1, 1]} : vector<28x112xf32> to vector<14x112xf32>
    %33 = arith.maximumf %31, %32 : vector<14x112xf32>
    %c0_20 = arith.constant 0 : index
    %c0_21 = arith.constant 0 : index
    %34 = vector.load %arg4[%c0_20, %c0_21] : memref<1x112xf32, #tpu.memory_space<vmem>>, vector<1x112xf32>
    %35 = vector.broadcast %34 : vector<1x112xf32> to vector<14x112xf32>
    %36 = arith.addf %33, %35 : vector<14x112xf32>
    %cst_22 = arith.constant 0.000000e+00 : f32
    %37 = vector.broadcast %cst_22 : f32 to vector<14x112xf32>
    %38 = arith.maximumf %36, %37 : vector<14x112xf32>
    %39 = arith.truncf %38 : vector<14x112xf32> to vector<14x112xbf16>
    %40 = vector.extract_strided_slice %39 {offsets = [0, 0], sizes = [10, 112], strides = [1, 1]} : vector<14x112xbf16> to vector<10x112xbf16>
    %c0_23 = arith.constant 0 : index
    %c0_24 = arith.constant 0 : index
    %c0_25 = arith.constant 0 : index
    %41 = vector.load %arg5[%c0_23, %c0_24, %c0_25] : memref<5x112x160xbf16, #tpu.memory_space<vmem>>, vector<1x112x160xbf16>
    %42 = vector.shape_cast %41 : vector<1x112x160xbf16> to vector<112x160xbf16>
    %cst_26 = arith.constant dense<0.000000e+00> : vector<10x160xf32>
    %43 = tpu.matmul %40, %42, %cst_26 {dimension_numbers = #tpu.dot_dimension_numbers<[1], [0], [0], [1], [0, 0, 1, 1], [], []>} : vector<10x112xbf16>, vector<112x160xbf16>, vector<10x160xf32> -> vector<10x160xf32>
    %44 = vector.extract_strided_slice %39 {offsets = [1, 0], sizes = [10, 112], strides = [1, 1]} : vector<14x112xbf16> to vector<10x112xbf16>
    %c1_27 = arith.constant 1 : index
    %c0_28 = arith.constant 0 : index
    %c0_29 = arith.constant 0 : index
    %45 = vector.load %arg5[%c1_27, %c0_28, %c0_29] : memref<5x112x160xbf16, #tpu.memory_space<vmem>>, vector<1x112x160xbf16>
    %46 = vector.shape_cast %45 : vector<1x112x160xbf16> to vector<112x160xbf16>
    %cst_30 = arith.constant dense<0.000000e+00> : vector<10x160xf32>
    %47 = tpu.matmul %44, %46, %cst_30 {dimension_numbers = #tpu.dot_dimension_numbers<[1], [0], [0], [1], [0, 0, 1, 1], [], []>} : vector<10x112xbf16>, vector<112x160xbf16>, vector<10x160xf32> -> vector<10x160xf32>
    %48 = arith.addf %43, %47 : vector<10x160xf32>
    %49 = vector.extract_strided_slice %39 {offsets = [2, 0], sizes = [10, 112], strides = [1, 1]} : vector<14x112xbf16> to vector<10x112xbf16>
    %c2_31 = arith.constant 2 : index
    %c0_32 = arith.constant 0 : index
    %c0_33 = arith.constant 0 : index
    %50 = vector.load %arg5[%c2_31, %c0_32, %c0_33] : memref<5x112x160xbf16, #tpu.memory_space<vmem>>, vector<1x112x160xbf16>
    %51 = vector.shape_cast %50 : vector<1x112x160xbf16> to vector<112x160xbf16>
    %cst_34 = arith.constant dense<0.000000e+00> : vector<10x160xf32>
    %52 = tpu.matmul %49, %51, %cst_34 {dimension_numbers = #tpu.dot_dimension_numbers<[1], [0], [0], [1], [0, 0, 1, 1], [], []>} : vector<10x112xbf16>, vector<112x160xbf16>, vector<10x160xf32> -> vector<10x160xf32>
    %53 = arith.addf %48, %52 : vector<10x160xf32>
    %54 = vector.extract_strided_slice %39 {offsets = [3, 0], sizes = [10, 112], strides = [1, 1]} : vector<14x112xbf16> to vector<10x112xbf16>
    %c3_35 = arith.constant 3 : index
    %c0_36 = arith.constant 0 : index
    %c0_37 = arith.constant 0 : index
    %55 = vector.load %arg5[%c3_35, %c0_36, %c0_37] : memref<5x112x160xbf16, #tpu.memory_space<vmem>>, vector<1x112x160xbf16>
    %56 = vector.shape_cast %55 : vector<1x112x160xbf16> to vector<112x160xbf16>
    %cst_38 = arith.constant dense<0.000000e+00> : vector<10x160xf32>
    %57 = tpu.matmul %54, %56, %cst_38 {dimension_numbers = #tpu.dot_dimension_numbers<[1], [0], [0], [1], [0, 0, 1, 1], [], []>} : vector<10x112xbf16>, vector<112x160xbf16>, vector<10x160xf32> -> vector<10x160xf32>
    %58 = arith.addf %53, %57 : vector<10x160xf32>
    %59 = vector.extract_strided_slice %39 {offsets = [4, 0], sizes = [10, 112], strides = [1, 1]} : vector<14x112xbf16> to vector<10x112xbf16>
    %c4_39 = arith.constant 4 : index
    %c0_40 = arith.constant 0 : index
    %c0_41 = arith.constant 0 : index
    %60 = vector.load %arg5[%c4_39, %c0_40, %c0_41] : memref<5x112x160xbf16, #tpu.memory_space<vmem>>, vector<1x112x160xbf16>
    %61 = vector.shape_cast %60 : vector<1x112x160xbf16> to vector<112x160xbf16>
    %cst_42 = arith.constant dense<0.000000e+00> : vector<10x160xf32>
    %62 = tpu.matmul %59, %61, %cst_42 {dimension_numbers = #tpu.dot_dimension_numbers<[1], [0], [0], [1], [0, 0, 1, 1], [], []>} : vector<10x112xbf16>, vector<112x160xbf16>, vector<10x160xf32> -> vector<10x160xf32>
    %63 = arith.addf %58, %62 : vector<10x160xf32>
    %64 = vector.extract_strided_slice %63 {offsets = [0, 0], sizes = [10, 80], strides = [1, 1]} : vector<10x160xf32> to vector<10x80xf32>
    %65 = vector.extract_strided_slice %63 {offsets = [0, 80], sizes = [10, 80], strides = [1, 1]} : vector<10x160xf32> to vector<10x80xf32>
    %66 = arith.maximumf %64, %65 : vector<10x80xf32>
    %c0_43 = arith.constant 0 : index
    %c0_44 = arith.constant 0 : index
    %67 = vector.load %arg6[%c0_43, %c0_44] : memref<10x10xf32, #tpu.memory_space<vmem>>, vector<10x10xf32>
    %cst_45 = arith.constant dense<0.000000e+00> : vector<10x80xf32>
    %68 = tpu.matmul %67, %66, %cst_45 {dimension_numbers = #tpu.dot_dimension_numbers<[1], [0], [0], [1], [0, 0, 1, 1], [], []>} : vector<10x10xf32>, vector<10x80xf32>, vector<10x80xf32> -> vector<10x80xf32>
    %69 = vector.extract_strided_slice %68 {offsets = [0, 0], sizes = [5, 80], strides = [1, 1]} : vector<10x80xf32> to vector<5x80xf32>
    %70 = vector.extract_strided_slice %68 {offsets = [5, 0], sizes = [5, 80], strides = [1, 1]} : vector<10x80xf32> to vector<5x80xf32>
    %71 = arith.maximumf %69, %70 : vector<5x80xf32>
    %c0_46 = arith.constant 0 : index
    %c0_47 = arith.constant 0 : index
    %72 = vector.load %arg7[%c0_46, %c0_47] : memref<1x80xf32, #tpu.memory_space<vmem>>, vector<1x80xf32>
    %73 = vector.broadcast %72 : vector<1x80xf32> to vector<5x80xf32>
    %74 = arith.addf %71, %73 : vector<5x80xf32>
    %cst_48 = arith.constant 0.000000e+00 : f32
    %75 = vector.broadcast %cst_48 : f32 to vector<5x80xf32>
    %76 = arith.maximumf %74, %75 : vector<5x80xf32>
    %77 = arith.truncf %76 : vector<5x80xf32> to vector<5x80xbf16>
    %78 = vector.extract_strided_slice %77 {offsets = [0, 0], sizes = [3, 80], strides = [1, 1]} : vector<5x80xbf16> to vector<3x80xbf16>
    %c0_49 = arith.constant 0 : index
    %c0_50 = arith.constant 0 : index
    %c0_51 = arith.constant 0 : index
    %79 = vector.load %arg8[%c0_49, %c0_50, %c0_51] : memref<3x80x64xbf16, #tpu.memory_space<vmem>>, vector<1x80x64xbf16>
    %80 = vector.shape_cast %79 : vector<1x80x64xbf16> to vector<80x64xbf16>
    %cst_52 = arith.constant dense<0.000000e+00> : vector<3x64xf32>
    %81 = tpu.matmul %78, %80, %cst_52 {dimension_numbers = #tpu.dot_dimension_numbers<[1], [0], [0], [1], [0, 0, 1, 1], [], []>} : vector<3x80xbf16>, vector<80x64xbf16>, vector<3x64xf32> -> vector<3x64xf32>
    %82 = vector.extract_strided_slice %77 {offsets = [1, 0], sizes = [3, 80], strides = [1, 1]} : vector<5x80xbf16> to vector<3x80xbf16>
    %c1_53 = arith.constant 1 : index
    %c0_54 = arith.constant 0 : index
    %c0_55 = arith.constant 0 : index
    %83 = vector.load %arg8[%c1_53, %c0_54, %c0_55] : memref<3x80x64xbf16, #tpu.memory_space<vmem>>, vector<1x80x64xbf16>
    %84 = vector.shape_cast %83 : vector<1x80x64xbf16> to vector<80x64xbf16>
    %cst_56 = arith.constant dense<0.000000e+00> : vector<3x64xf32>
    %85 = tpu.matmul %82, %84, %cst_56 {dimension_numbers = #tpu.dot_dimension_numbers<[1], [0], [0], [1], [0, 0, 1, 1], [], []>} : vector<3x80xbf16>, vector<80x64xbf16>, vector<3x64xf32> -> vector<3x64xf32>
    %86 = arith.addf %81, %85 : vector<3x64xf32>
    %87 = vector.extract_strided_slice %77 {offsets = [2, 0], sizes = [3, 80], strides = [1, 1]} : vector<5x80xbf16> to vector<3x80xbf16>
    %c2_57 = arith.constant 2 : index
    %c0_58 = arith.constant 0 : index
    %c0_59 = arith.constant 0 : index
    %88 = vector.load %arg8[%c2_57, %c0_58, %c0_59] : memref<3x80x64xbf16, #tpu.memory_space<vmem>>, vector<1x80x64xbf16>
    %89 = vector.shape_cast %88 : vector<1x80x64xbf16> to vector<80x64xbf16>
    %cst_60 = arith.constant dense<0.000000e+00> : vector<3x64xf32>
    %90 = tpu.matmul %87, %89, %cst_60 {dimension_numbers = #tpu.dot_dimension_numbers<[1], [0], [0], [1], [0, 0, 1, 1], [], []>} : vector<3x80xbf16>, vector<80x64xbf16>, vector<3x64xf32> -> vector<3x64xf32>
    %91 = arith.addf %86, %90 : vector<3x64xf32>
    %92 = vector.extract_strided_slice %91 {offsets = [0, 0], sizes = [3, 32], strides = [1, 1]} : vector<3x64xf32> to vector<3x32xf32>
    %93 = vector.extract_strided_slice %91 {offsets = [0, 32], sizes = [3, 32], strides = [1, 1]} : vector<3x64xf32> to vector<3x32xf32>
    %94 = arith.maximumf %92, %93 : vector<3x32xf32>
    %c0_61 = arith.constant 0 : index
    %c0_62 = arith.constant 0 : index
    %95 = vector.load %arg9[%c0_61, %c0_62] : memref<2x3xf32, #tpu.memory_space<vmem>>, vector<2x3xf32>
    %cst_63 = arith.constant dense<0.000000e+00> : vector<2x32xf32>
    %96 = tpu.matmul %95, %94, %cst_63 {dimension_numbers = #tpu.dot_dimension_numbers<[1], [0], [0], [1], [0, 0, 1, 1], [], []>} : vector<2x3xf32>, vector<3x32xf32>, vector<2x32xf32> -> vector<2x32xf32>
    %97 = vector.extract_strided_slice %96 {offsets = [0, 0], sizes = [1, 32], strides = [1, 1]} : vector<2x32xf32> to vector<1x32xf32>
    %98 = vector.extract_strided_slice %96 {offsets = [1, 0], sizes = [1, 32], strides = [1, 1]} : vector<2x32xf32> to vector<1x32xf32>
    %99 = arith.maximumf %97, %98 : vector<1x32xf32>
    %c0_64 = arith.constant 0 : index
    %c0_65 = arith.constant 0 : index
    %100 = vector.load %arg10[%c0_64, %c0_65] : memref<1x32xf32, #tpu.memory_space<vmem>>, vector<1x32xf32>
    %101 = arith.addf %99, %100 : vector<1x32xf32>
    %cst_66 = arith.constant 0.000000e+00 : f32
    %102 = vector.broadcast %cst_66 : f32 to vector<1x32xf32>
    %103 = arith.maximumf %101, %102 : vector<1x32xf32>
    %104 = arith.truncf %103 : vector<1x32xf32> to vector<1x32xbf16>
    %c0_67 = arith.constant 0 : index
    %c0_68 = arith.constant 0 : index
    %105 = vector.load %arg11[%c0_67, %c0_68] : memref<32x32xbf16, #tpu.memory_space<vmem>>, vector<32x32xbf16>
    %cst_69 = arith.constant dense<0.000000e+00> : vector<1x32xf32>
    %106 = tpu.matmul %104, %105, %cst_69 {dimension_numbers = #tpu.dot_dimension_numbers<[1], [0], [0], [1], [0, 0, 1, 1], [], []>} : vector<1x32xbf16>, vector<32x32xbf16>, vector<1x32xf32> -> vector<1x32xf32>
    %c0_70 = arith.constant 0 : index
    %c0_71 = arith.constant 0 : index
    %107 = vector.load %arg12[%c0_70, %c0_71] : memref<1x32xf32, #tpu.memory_space<vmem>>, vector<1x32xf32>
    %108 = arith.addf %106, %107 : vector<1x32xf32>
    %cst_72 = arith.constant 0.000000e+00 : f32
    %109 = vector.broadcast %cst_72 : f32 to vector<1x32xf32>
    %110 = arith.maximumf %108, %109 : vector<1x32xf32>
    %111 = arith.truncf %110 : vector<1x32xf32> to vector<1x32xbf16>
    %c0_73 = arith.constant 0 : index
    %c0_74 = arith.constant 0 : index
    %112 = vector.load %arg13[%c0_73, %c0_74] : memref<32x16xbf16, #tpu.memory_space<vmem>>, vector<32x16xbf16>
    %cst_75 = arith.constant dense<0.000000e+00> : vector<1x16xf32>
    %113 = tpu.matmul %111, %112, %cst_75 {dimension_numbers = #tpu.dot_dimension_numbers<[1], [0], [0], [1], [0, 0, 1, 1], [], []>} : vector<1x32xbf16>, vector<32x16xbf16>, vector<1x16xf32> -> vector<1x16xf32>
    %c0_76 = arith.constant 0 : index
    %c0_77 = arith.constant 0 : index
    %114 = vector.load %arg14[%c0_76, %c0_77] : memref<1x16xf32, #tpu.memory_space<vmem>>, vector<1x16xf32>
    %115 = arith.addf %113, %114 : vector<1x16xf32>
    %cst_78 = arith.constant 0.000000e+00 : f32
    %116 = vector.broadcast %cst_78 : f32 to vector<1x16xf32>
    %117 = arith.maximumf %115, %116 : vector<1x16xf32>
    %118 = arith.truncf %117 : vector<1x16xf32> to vector<1x16xbf16>
    %c0_79 = arith.constant 0 : index
    %c0_80 = arith.constant 0 : index
    %119 = vector.load %arg15[%c0_79, %c0_80] : memref<16x2xbf16, #tpu.memory_space<vmem>>, vector<16x2xbf16>
    %cst_81 = arith.constant dense<0.000000e+00> : vector<1x2xf32>
    %120 = tpu.matmul %118, %119, %cst_81 {dimension_numbers = #tpu.dot_dimension_numbers<[1], [0], [0], [1], [0, 0, 1, 1], [], []>} : vector<1x16xbf16>, vector<16x2xbf16>, vector<1x2xf32> -> vector<1x2xf32>
    %c0_82 = arith.constant 0 : index
    %c0_83 = arith.constant 0 : index
    %121 = vector.load %arg16[%c0_82, %c0_83] : memref<1x2xf32, #tpu.memory_space<vmem>>, vector<1x2xf32>
    %122 = arith.addf %120, %121 : vector<1x2xf32>
    %c0_84 = arith.constant 0 : index
    %c0_85 = arith.constant 0 : index
    %c0_86 = arith.constant 0 : index
    %123 = vector.load %arg17[%c0_84, %c0_85, %c0_86] : memref<1x1x2xf32, #tpu.memory_space<vmem>>, vector<1x1x2xf32>
    %124 = vector.shape_cast %123 : vector<1x1x2xf32> to vector<1x2xf32>
    %125 = vector.shape_cast %122 : vector<1x2xf32> to vector<1x1x2xf32>
    tpu.vector_store %arg17[%c0_84, %c0_85, %c0_86], %125 {strides = array<i32>} : memref<1x1x2xf32, #tpu.memory_space<vmem>>, vector<1x1x2xf32>,
    return
  }
  func.func @transform_0(%arg0: i32) -> (i32, i32, i32) {
    %c0_i32 = arith.constant 0 : i32
    %c0_i32_0 = arith.constant 0 : i32
    %c0_i32_1 = arith.constant 0 : i32
    return %arg0, %c0_i32, %c0_i32_0 : i32, i32, i32
  }
  func.func @transform_1(%arg0: i32) -> (i32, i32, i32) {
    %c0_i32 = arith.constant 0 : i32
    %c0_i32_0 = arith.constant 0 : i32
    %c0_i32_1 = arith.constant 0 : i32
    %c0_i32_2 = arith.constant 0 : i32
    return %c0_i32, %c0_i32_0, %c0_i32_1 : i32, i32, i32
  }
  func.func @transform_2(%arg0: i32) -> (i32, i32) {
    %c0_i32 = arith.constant 0 : i32
    %c0_i32_0 = arith.constant 0 : i32
    %c0_i32_1 = arith.constant 0 : i32
    return %c0_i32, %c0_i32_0 : i32, i32
  }
  func.func @transform_3(%arg0: i32) -> (i32, i32) {
    %c0_i32 = arith.constant 0 : i32
    %c0_i32_0 = arith.constant 0 : i32
    %c0_i32_1 = arith.constant 0 : i32
    return %c0_i32, %c0_i32_0 : i32, i32
  }
  func.func @transform_4(%arg0: i32) -> (i32, i32, i32) {
    %c0_i32 = arith.constant 0 : i32
    %c0_i32_0 = arith.constant 0 : i32
    %c0_i32_1 = arith.constant 0 : i32
    %c0_i32_2 = arith.constant 0 : i32
    return %c0_i32, %c0_i32_0, %c0_i32_1 : i32, i32, i32
  }
  func.func @transform_5(%arg0: i32) -> (i32, i32) {
    %c0_i32 = arith.constant 0 : i32
    %c0_i32_0 = arith.constant 0 : i32
    %c0_i32_1 = arith.constant 0 : i32
    return %c0_i32, %c0_i32_0 : i32, i32
  }
  func.func @transform_6(%arg0: i32) -> (i32, i32) {
    %c0_i32 = arith.constant 0 : i32
    %c0_i32_0 = arith.constant 0 : i32
    %c0_i32_1 = arith.constant 0 : i32
    return %c0_i32, %c0_i32_0 : i32, i32
  }
  func.func @transform_7(%arg0: i32) -> (i32, i32, i32) {
    %c0_i32 = arith.constant 0 : i32
    %c0_i32_0 = arith.constant 0 : i32
    %c0_i32_1 = arith.constant 0 : i32
    %c0_i32_2 = arith.constant 0 : i32
    return %c0_i32, %c0_i32_0, %c0_i32_1 : i32, i32, i32
  }
  func.func @transform_8(%arg0: i32) -> (i32, i32) {
    %c0_i32 = arith.constant 0 : i32
    %c0_i32_0 = arith.constant 0 : i32
    %c0_i32_1 = arith.constant 0 : i32
    return %c0_i32, %c0_i32_0 : i32, i32
  }
  func.func @transform_9(%arg0: i32) -> (i32, i32) {
    %c0_i32 = arith.constant 0 : i32
    %c0_i32_0 = arith.constant 0 : i32
    %c0_i32_1 = arith.constant 0 : i32
    return %c0_i32, %c0_i32_0 : i32, i32
  }
  func.func @transform_10(%arg0: i32) -> (i32, i32) {
    %c0_i32 = arith.constant 0 : i32
    %c0_i32_0 = arith.constant 0 : i32
    %c0_i32_1 = arith.constant 0 : i32
    return %c0_i32, %c0_i32_0 : i32, i32
  }
  func.func @transform_11(%arg0: i32) -> (i32, i32) {
    %c0_i32 = arith.constant 0 : i32
    %c0_i32_0 = arith.constant 0 : i32
    %c0_i32_1 = arith.constant 0 : i32
    return %c0_i32, %c0_i32_0 : i32, i32
  }
  func.func @transform_12(%arg0: i32) -> (i32, i32) {
    %c0_i32 = arith.constant 0 : i32
    %c0_i32_0 = arith.constant 0 : i32
    %c0_i32_1 = arith.constant 0 : i32
    return %c0_i32, %c0_i32_0 : i32, i32
  }
  func.func @transform_13(%arg0: i32) -> (i32, i32) {
    %c0_i32 = arith.constant 0 : i32
    %c0_i32_0 = arith.constant 0 : i32
    %c0_i32_1 = arith.constant 0 : i32
    return %c0_i32, %c0_i32_0 : i32, i32
  }
  func.func @transform_14(%arg0: i32) -> (i32, i32) {
    %c0_i32 = arith.constant 0 : i32
    %c0_i32_0 = arith.constant 0 : i32
    %c0_i32_1 = arith.constant 0 : i32
    return %c0_i32, %c0_i32_0 : i32, i32
  }
  func.func @transform_15(%arg0: i32) -> (i32, i32) {
    %c0_i32 = arith.constant 0 : i32
    %c0_i32_0 = arith.constant 0 : i32
    %c0_i32_1 = arith.constant 0 : i32
    return %c0_i32, %c0_i32_0 : i32, i32
  }
  func.func @transform_16(%arg0: i32) -> (i32, i32, i32) {
    %c0_i32 = arith.constant 0 : i32
    %c0_i32_0 = arith.constant 0 : i32
    %c0_i32_1 = arith.constant 0 : i32
    return %arg0, %c0_i32, %c0_i32_0 : i32, i32, i32
  }
}

</mosaic_0001>

<llo_original>
// kernel: driving_net_forward.1
$region0: #{driving_net_forward.1}
  #allocation0 [shape = 'u32[]', space=smem, size = 0x4, offset = 0x4, fixed_abs, tag = 'smem constant byte address 0x4 - core index']
  #allocation1 [shape = 'u32[144,128]{1,0:T(1,128)}', space=vmem, size = 0x12000, scoped, tag = 'internal scratch']
  %s0 = inlined_call_operand.vmem [shape: bf16[2,32,96], index: 0, kind: input, shape index: {}]
  %s1 = inlined_call_operand.vmem [shape: bf16[5,96,224], index: 1, kind: input, shape index: {}]
  %s2 = inlined_call_operand.vmem [shape: f32[28,28], index: 2, kind: input, shape index: {}]
  %s3 = inlined_call_operand.vmem [shape: f32[1,112], index: 3, kind: input, shape index: {}]
  %s4 = inlined_call_operand.vmem [shape: bf16[5,112,160], index: 4, kind: input, shape index: {}]
  %s5 = inlined_call_operand.vmem [shape: f32[10,10], index: 5, kind: input, shape index: {}]
  %s6 = inlined_call_operand.vmem [shape: f32[1,80], index: 6, kind: input, shape index: {}]
  %s7 = inlined_call_operand.vmem [shape: bf16[3,80,64], index: 7, kind: input, shape index: {}]
  %s8 = inlined_call_operand.vmem [shape: f32[2,3], index: 8, kind: input, shape index: {}]
  %s9 = inlined_call_operand.vmem [shape: f32[1,32], index: 9, kind: input, shape index: {}]
  %s10 = inlined_call_operand.vmem [shape: bf16[32,32], index: 10, kind: input, shape index: {}]
  %s11 = inlined_call_operand.vmem [shape: f32[1,32], index: 11, kind: input, shape index: {}]
  %s12 = inlined_call_operand.vmem [shape: bf16[32,16], index: 12, kind: input, shape index: {}]
  %s13 = inlined_call_operand.vmem [shape: f32[1,16], index: 13, kind: input, shape index: {}]
  %s14 = inlined_call_operand.vmem [shape: bf16[16,2], index: 14, kind: input, shape index: {}]
  %s15 = inlined_call_operand.vmem [shape: f32[1,2], index: 15, kind: input, shape index: {}]
  %s16 = inlined_call_operand.hbm [shape: f32[2,1,2], index: 16, kind: output, shape index: {}]
  %s17 = sld [smem:[#allocation0]]
  $region97: #{driving_net_forward.1} parent=0
    _
  %s19 = ssub.s32 1, %s17
  %s20 = scalar_select 0, %s19, %s17
  $region1: #{driving_net_forward.1} parent=0
    #allocation2 [shape = 'u8[1024]{0}', space=vmem, size = 0x400, scoped, tag = 'output window, operand 0']
    #allocation3 [shape = 's32[2]{0}', space=sflag, size = 0x8, scoped, tag = 'scoped memory for driving_net_forward.1']
    %21 = vsyncpa [#allocation3], 0
    %s22 = scalar_lea.sflag [#allocation3], 1
    %23 = vsyncpa %s22, 0
    loop: start=0, step=1, limit=4
    $region2: #{driving_net_forward.1} parent=1 // loop_pre_header
      _
    $region3: #{driving_net_forward.1} parent=1 // loop_header
      %s25 = sphi 0, %s29
      %p26 = scmp.ge.s32.totalorder %s25, 4
      %s35 = sphi 0, %s37
      %s38 = sphi 0, %s35
      %s39 = sphi 0, %s38
      %s55 = sphi 0, %s39
      %s59 = sphi 0, %s59
      %s61 = sphi 0, %s59
      %s62 = sphi 0, %s61
      %s76 = sphi 0, %s62
      %s80 = sphi 0, %s80
      %s82 = sphi 0, %s80
      %s83 = sphi 0, %s82
      %s97 = sphi 0, %s83
      %s101 = sphi 0, %s101
      %s103 = sphi 0, %s101
      %s104 = sphi 0, %s103
      %s118 = sphi 0, %s104
      %s122 = sphi 0, %s122
      %s124 = sphi 0, %s122
      %s125 = sphi 0, %s124
      %s139 = sphi 0, %s125
      %s143 = sphi 0, %s143
      %s145 = sphi 0, %s143
      %s146 = sphi 0, %s145
      %s160 = sphi 0, %s146
      %s164 = sphi 0, %s164
      %s166 = sphi 0, %s164
      %s167 = sphi 0, %s166
      %s181 = sphi 0, %s167
      %s185 = sphi 0, %s185
      %s187 = sphi 0, %s185
      %s188 = sphi 0, %s187
      %s202 = sphi 0, %s188
      %s206 = sphi 0, %s206
      %s208 = sphi 0, %s206
      %s209 = sphi 0, %s208
      %s223 = sphi 0, %s209
      %s227 = sphi 0, %s227
      %s229 = sphi 0, %s227
      %s230 = sphi 0, %s229
      %s244 = sphi 0, %s230
      %s248 = sphi 0, %s248
      %s250 = sphi 0, %s248
      %s251 = sphi 0, %s250
      %s265 = sphi 0, %s251
      %s269 = sphi 0, %s269
      %s271 = sphi 0, %s269
      %s272 = sphi 0, %s271
      %s286 = sphi 0, %s272
      %s290 = sphi 0, %s290
      %s292 = sphi 0, %s290
      %s293 = sphi 0, %s292
      %s307 = sphi 0, %s293
      %s311 = sphi 0, %s311
      %s313 = sphi 0, %s311
      %s314 = sphi 0, %s313
      %s328 = sphi 0, %s314
      %s332 = sphi 0, %s332
      %s334 = sphi 0, %s332
      %s335 = sphi 0, %s334
      %s349 = sphi 0, %s335
      %s353 = sphi 0, %s353
      %s355 = sphi 0, %s353
      %s356 = sphi 0, %s355
      %s370 = sphi 0, %s356
      %s376 = sphi 0, %s378
      %s379 = sphi 0, %s376
      %s380 = sphi 0, %s379
      %s396 = sphi 0, %s380
    $region4: #{driving_net_forward.1} parent=1 // loop_header_branch
      %28 = sbr.rel (%p26) target = $region8
    $region5: #{driving_net_forward.1} parent=1 // loop_body
      %s30 = ssub.s32 %s25, 1
      %s31 = ssub.s32 %s25, 2
      %s32 = sadd.s32 %s25, 1
      %s33 = ssub.s32 %s25, %s32
      %p34 = scmp.eq.s32.totalorder %s33, 0
      %s36 = sadd.s32 %s35, 1
      %s37 = scalar_select %p34, %s35, %s36
      %p40 = pneg %p34
      %p41 = scmp.eq.s32.totalorder %s25, 1
      %p42 = por %p40, %p41
      %p43 = scmp.ne.s32.totalorder %s35, %s38
      %p44 = scmp.eq.s32.totalorder %s25, 0
      %p45 = por %p43, %p44
      %p46 = scmp.ne.s32.totalorder %s35, %s38
      %p47 = scmp.eq.s32.totalorder %s30, 1
      %p48 = por %p46, %p47
      %p49 = scmp.ne.s32.totalorder %s38, %s39
      %p50 = scmp.eq.s32.totalorder %s30, 0
      %p51 = por %p49, %p50
      %p52 = scmp.ne.s32.totalorder %s38, %s39
      %p53 = scmp.eq.s32.totalorder %s31, 1
      %p54 = por %p52, %p53
      %p56 = scmp.ne.s32.totalorder %s39, %s55
      %p57 = scmp.eq.s32.totalorder %s31, 0
      %p58 = por %p56, %p57
      %s60 = sadd.s32 %s59, 1
      %p63 = scmp.eq.s32.totalorder %s25, 1
      %p64 = scmp.ne.s32.totalorder %s59, %s61
      %p65 = scmp.eq.s32.totalorder %s25, 0
      %p66 = por %p64, %p65
      %p67 = scmp.ne.s32.totalorder %s59, %s61
      %p68 = scmp.eq.s32.totalorder %s30, 1
      %p69 = por %p67, %p68
      %p70 = scmp.ne.s32.totalorder %s61, %s62
      %p71 = scmp.eq.s32.totalorder %s30, 0
      %p72 = por %p70, %p71
      %p73 = scmp.ne.s32.totalorder %s61, %s62
      %p74 = scmp.eq.s32.totalorder %s31, 1
      %p75 = por %p73, %p74
      %p77 = scmp.ne.s32.totalorder %s62, %s76
      %p78 = scmp.eq.s32.totalorder %s31, 0
      %p79 = por %p77, %p78
      %s81 = sadd.s32 %s80, 1
      %p84 = scmp.eq.s32.totalorder %s25, 1
      %p85 = scmp.ne.s32.totalorder %s80, %s82
      %p86 = scmp.eq.s32.totalorder %s25, 0
      %p87 = por %p85, %p86
      %p88 = scmp.ne.s32.totalorder %s80, %s82
      %p89 = scmp.eq.s32.totalorder %s30, 1
      %p90 = por %p88, %p89
      %p91 = scmp.ne.s32.totalorder %s82, %s83
      %p92 = scmp.eq.s32.totalorder %s30, 0
      %p93 = por %p91, %p92
      %p94 = scmp.ne.s32.totalorder %s82, %s83
      %p95 = scmp.eq.s32.totalorder %s31, 1
      %p96 = por %p94, %p95
      %p98 = scmp.ne.s32.totalorder %s83, %s97
      %p99 = scmp.eq.s32.totalorder %s31, 0
      %p100 = por %p98, %p99
      %s102 = sadd.s32 %s101, 1
      %p105 = scmp.eq.s32.totalorder %s25, 1
      %p106 = scmp.ne.s32.totalorder %s101, %s103
      %p107 = scmp.eq.s32.totalorder %s25, 0
      %p108 = por %p106, %p107
      %p109 = scmp.ne.s32.totalorder %s101, %s103
      %p110 = scmp.eq.s32.totalorder %s30, 1
      %p111 = por %p109, %p110
      %p112 = scmp.ne.s32.totalorder %s103, %s104
      %p113 = scmp.eq.s32.totalorder %s30, 0
      %p114 = por %p112, %p113
      %p115 = scmp.ne.s32.totalorder %s103, %s104
      %p116 = scmp.eq.s32.totalorder %s31, 1
      %p117 = por %p115, %p116
      %p119 = scmp.ne.s32.totalorder %s104, %s118
      %p120 = scmp.eq.s32.totalorder %s31, 0
      %p121 = por %p119, %p120
      %s123 = sadd.s32 %s122, 1
      %p126 = scmp.eq.s32.totalorder %s25, 1
      %p127 = scmp.ne.s32.totalorder %s122, %s124
      %p128 = scmp.eq.s32.totalorder %s25, 0
      %p129 = por %p127, %p128
      %p130 = scmp.ne.s32.totalorder %s122, %s124
      %p131 = scmp.eq.s32.totalorder %s30, 1
      %p132 = por %p130, %p131
      %p133 = scmp.ne.s32.totalorder %s124, %s125
      %p134 = scmp.eq.s32.totalorder %s30, 0
      %p135 = por %p133, %p134
      %p136 = scmp.ne.s32.totalorder %s124, %s125
      %p137 = scmp.eq.s32.totalorder %s31, 1
      %p138 = por %p136, %p137
      %p140 = scmp.ne.s32.totalorder %s125, %s139
      %p141 = scmp.eq.s32.totalorder %s31, 0
      %p142 = por %p140, %p141
      %s144 = sadd.s32 %s143, 1
      %p147 = scmp.eq.s32.totalorder %s25, 1
      %p148 = scmp.ne.s32.totalorder %s143, %s145
      %p149 = scmp.eq.s32.totalorder %s25, 0
      %p150 = por %p148, %p149
      %p151 = scmp.ne.s32.totalorder %s143, %s145
      %p152 = scmp.eq.s32.totalorder %s30, 1
      %p153 = por %p151, %p152
      %p154 = scmp.ne.s32.totalorder %s145, %s146
      %p155 = scmp.eq.s32.totalorder %s30, 0
      %p156 = por %p154, %p155
      %p157 = scmp.ne.s32.totalorder %s145, %s146
      %p158 = scmp.eq.s32.totalorder %s31, 1
      %p159 = por %p157, %p158
      %p161 = scmp.ne.s32.totalorder %s146, %s160
      %p162 = scmp.eq.s32.totalorder %s31, 0
      %p163 = por %p161, %p162
      %s165 = sadd.s32 %s164, 1
      %p168 = scmp.eq.s32.totalorder %s25, 1
      %p169 = scmp.ne.s32.totalorder %s164, %s166
      %p170 = scmp.eq.s32.totalorder %s25, 0
      %p171 = por %p169, %p170
      %p172 = scmp.ne.s32.totalorder %s164, %s166
      %p173 = scmp.eq.s32.totalorder %s30, 1
      %p174 = por %p172, %p173
      %p175 = scmp.ne.s32.totalorder %s166, %s167
      %p176 = scmp.eq.s32.totalorder %s30, 0
      %p177 = por %p175, %p176
      %p178 = scmp.ne.s32.totalorder %s166, %s167
      %p179 = scmp.eq.s32.totalorder %s31, 1
      %p180 = por %p178, %p179
      %p182 = scmp.ne.s32.totalorder %s167, %s181
      %p183 = scmp.eq.s32.totalorder %s31, 0
      %p184 = por %p182, %p183
      %s186 = sadd.s32 %s185, 1
      %p189 = scmp.eq.s32.totalorder %s25, 1
      %p190 = scmp.ne.s32.totalorder %s185, %s187
      %p191 = scmp.eq.s32.totalorder %s25, 0
      %p192 = por %p190, %p191
      %p193 = scmp.ne.s32.totalorder %s185, %s187
      %p194 = scmp.eq.s32.totalorder %s30, 1
      %p195 = por %p193, %p194
      %p196 = scmp.ne.s32.totalorder %s187, %s188
      %p197 = scmp.eq.s32.totalorder %s30, 0
      %p198 = por %p196, %p197
      %p199 = scmp.ne.s32.totalorder %s187, %s188
      %p200 = scmp.eq.s32.totalorder %s31, 1
      %p201 = por %p199, %p200
      %p203 = scmp.ne.s32.totalorder %s188, %s202
      %p204 = scmp.eq.s32.totalorder %s31, 0
      %p205 = por %p203, %p204
      %s207 = sadd.s32 %s206, 1
      %p210 = scmp.eq.s32.totalorder %s25, 1
      %p211 = scmp.ne.s32.totalorder %s206, %s208
      %p212 = scmp.eq.s32.totalorder %s25, 0
      %p213 = por %p211, %p212
      %p214 = scmp.ne.s32.totalorder %s206, %s208
      %p215 = scmp.eq.s32.totalorder %s30, 1
      %p216 = por %p214, %p215
      %p217 = scmp.ne.s32.totalorder %s208, %s209
      %p218 = scmp.eq.s32.totalorder %s30, 0
      %p219 = por %p217, %p218
      %p220 = scmp.ne.s32.totalorder %s208, %s209
      %p221 = scmp.eq.s32.totalorder %s31, 1
      %p222 = por %p220, %p221
      %p224 = scmp.ne.s32.totalorder %s209, %s223
      %p225 = scmp.eq.s32.totalorder %s31, 0
      %p226 = por %p224, %p225
      %s228 = sadd.s32 %s227, 1
      %p231 = scmp.eq.s32.totalorder %s25, 1
      %p232 = scmp.ne.s32.totalorder %s227, %s229
      %p233 = scmp.eq.s32.totalorder %s25, 0
      %p234 = por %p232, %p233
      %p235 = scmp.ne.s32.totalorder %s227, %s229
      %p236 = scmp.eq.s32.totalorder %s30, 1
      %p237 = por %p235, %p236
      %p238 = scmp.ne.s32.totalorder %s229, %s230
      %p239 = scmp.eq.s32.totalorder %s30, 0
      %p240 = por %p238, %p239
      %p241 = scmp.ne.s32.totalorder %s229, %s230
      %p242 = scmp.eq.s32.totalorder %s31, 1
      %p243 = por %p241, %p242
      %p245 = scmp.ne.s32.totalorder %s230, %s244
      %p246 = scmp.eq.s32.totalorder %s31, 0
      %p247 = por %p245, %p246
      %s249 = sadd.s32 %s248, 1
      %p252 = scmp.eq.s32.totalorder %s25, 1
      %p253 = scmp.ne.s32.totalorder %s248, %s250
      %p254 = scmp.eq.s32.totalorder %s25, 0
      %p255 = por %p253, %p254
      %p256 = scmp.ne.s32.totalorder %s248, %s250
      %p257 = scmp.eq.s32.totalorder %s30, 1
      %p258 = por %p256, %p257
      %p259 = scmp.ne.s32.totalorder %s250, %s251
      %p260 = scmp.eq.s32.totalorder %s30, 0
      %p261 = por %p259, %p260
      %p262 = scmp.ne.s32.totalorder %s250, %s251
      %p263 = scmp.eq.s32.totalorder %s31, 1
      %p264 = por %p262, %p263
      %p266 = scmp.ne.s32.totalorder %s251, %s265
      %p267 = scmp.eq.s32.totalorder %s31, 0
      %p268 = por %p266, %p267
      %s270 = sadd.s32 %s269, 1
      %p273 = scmp.eq.s32.totalorder %s25, 1
      %p274 = scmp.ne.s32.totalorder %s269, %s271
      %p275 = scmp.eq.s32.totalorder %s25, 0
      %p276 = por %p274, %p275
      %p277 = scmp.ne.s32.totalorder %s269, %s271
      %p278 = scmp.eq.s32.totalorder %s30, 1
      %p279 = por %p277, %p278
      %p280 = scmp.ne.s32.totalorder %s271, %s272
      %p281 = scmp.eq.s32.totalorder %s30, 0
      %p282 = por %p280, %p281
      %p283 = scmp.ne.s32.totalorder %s271, %s272
      %p284 = scmp.eq.s32.totalorder %s31, 1
      %p285 = por %p283, %p284
      %p287 = scmp.ne.s32.totalorder %s272, %s286
      %p288 = scmp.eq.s32.totalorder %s31, 0
      %p289 = por %p287, %p288
      %s291 = sadd.s32 %s290, 1
      %p294 = scmp.eq.s32.totalorder %s25, 1
      %p295 = scmp.ne.s32.totalorder %s290, %s292
      %p296 = scmp.eq.s32.totalorder %s25, 0
      %p297 = por %p295, %p296
      %p298 = scmp.ne.s32.totalorder %s290, %s292
      %p299 = scmp.eq.s32.totalorder %s30, 1
      %p300 = por %p298, %p299
      %p301 = scmp.ne.s32.totalorder %s292, %s293
      %p302 = scmp.eq.s32.totalorder %s30, 0
      %p303 = por %p301, %p302
      %p304 = scmp.ne.s32.totalorder %s292, %s293
      %p305 = scmp.eq.s32.totalorder %s31, 1
      %p306 = por %p304, %p305
      %p308 = scmp.ne.s32.totalorder %s293, %s307
      %p309 = scmp.eq.s32.totalorder %s31, 0
      %p310 = por %p308, %p309
      %s312 = sadd.s32 %s311, 1
      %p315 = scmp.eq.s32.totalorder %s25, 1
      %p316 = scmp.ne.s32.totalorder %s311, %s313
      %p317 = scmp.eq.s32.totalorder %s25, 0
      %p318 = por %p316, %p317
      %p319 = scmp.ne.s32.totalorder %s311, %s313
      %p320 = scmp.eq.s32.totalorder %s30, 1
      %p321 = por %p319, %p320
      %p322 = scmp.ne.s32.totalorder %s313, %s314
      %p323 = scmp.eq.s32.totalorder %s30, 0
      %p324 = por %p322, %p323
      %p325 = scmp.ne.s32.totalorder %s313, %s314
      %p326 = scmp.eq.s32.totalorder %s31, 1
      %p327 = por %p325, %p326
      %p329 = scmp.ne.s32.totalorder %s314, %s328
      %p330 = scmp.eq.s32.totalorder %s31, 0
      %p331 = por %p329, %p330
      %s333 = sadd.s32 %s332, 1
      %p336 = scmp.eq.s32.totalorder %s25, 1
      %p337 = scmp.ne.s32.totalorder %s332, %s334
      %p338 = scmp.eq.s32.totalorder %s25, 0
      %p339 = por %p337, %p338
      %p340 = scmp.ne.s32.totalorder %s332, %s334
      %p341 = scmp.eq.s32.totalorder %s30, 1
      %p342 = por %p340, %p341
      %p343 = scmp.ne.s32.totalorder %s334, %s335
      %p344 = scmp.eq.s32.totalorder %s30, 0
      %p345 = por %p343, %p344
      %p346 = scmp.ne.s32.totalorder %s334, %s335
      %p347 = scmp.eq.s32.totalorder %s31, 1
      %p348 = por %p346, %p347
      %p350 = scmp.ne.s32.totalorder %s335, %s349
      %p351 = scmp.eq.s32.totalorder %s31, 0
      %p352 = por %p350, %p351
      %s354 = sadd.s32 %s353, 1
      %p357 = scmp.eq.s32.totalorder %s25, 1
      %p358 = scmp.ne.s32.totalorder %s353, %s355
      %p359 = scmp.eq.s32.totalorder %s25, 0
      %p360 = por %p358, %p359
      %p361 = scmp.ne.s32.totalorder %s353, %s355
      %p362 = scmp.eq.s32.totalorder %s30, 1
      %p363 = por %p361, %p362
      %p364 = scmp.ne.s32.totalorder %s355, %s356
      %p365 = scmp.eq.s32.totalorder %s30, 0
      %p366 = por %p364, %p365
      %p367 = scmp.ne.s32.totalorder %s355, %s356
      %p368 = scmp.eq.s32.totalorder %s31, 1
      %p369 = por %p367, %p368
      %p371 = scmp.ne.s32.totalorder %s356, %s370
      %p372 = scmp.eq.s32.totalorder %s31, 0
      %p373 = por %p371, %p372
      %s374 = ssub.s32 %s25, %s32
      %p375 = scmp.eq.s32.totalorder %s374, 0
      %s377 = sadd.s32 %s376, 1
      %s378 = scalar_select %p375, %s376, %s377
      %p381 = pneg %p375
      %p382 = scmp.eq.s32.totalorder %s25, 1
      %p383 = por %p381, %p382
      %p384 = scmp.ne.s32.totalorder %s376, %s379
      %p385 = scmp.eq.s32.totalorder %s25, 0
      %p386 = por %p384, %p385
      %p387 = scmp.ne.s32.totalorder %s376, %s379
      %p388 = scmp.eq.s32.totalorder %s30, 1
      %p389 = por %p387, %p388
      %p390 = scmp.ne.s32.totalorder %s379, %s380
      %p391 = scmp.eq.s32.totalorder %s30, 0
      %p392 = por %p390, %p391
      %p393 = scmp.ne.s32.totalorder %s379, %s380
      %p394 = scmp.eq.s32.totalorder %s31, 1
      %p395 = por %p393, %p394
      %p397 = scmp.ne.s32.totalorder %s380, %s396
      %p398 = scmp.eq.s32.totalorder %s31, 0
      %p399 = por %p397, %p398
      %p400 = scmp.le.s32.totalorder 1, %s25
      %p401 = scmp.lt.s32.totalorder %s25, 3
      %p402 = pnand %p400, %p401
      %p403 = pneg %p402
      // Predicated region
      $region9: #{driving_net_forward.1} parent=5 // pred_check
        _
      $region10: #{driving_net_forward.1} parent=5 // pred_check_branch
        %405 = sbr.rel (%p402) target = $region12
      $region11: #{driving_net_forward.1} parent=5 // pred_region
        %s406 = ssub.s32 %s25, 1
        // Predicated region
        $region13: #{driving_net_forward.1} parent=11 // pred_check
          %p407 = pneg %p72
        $region14: #{driving_net_forward.1} parent=11 // pred_check_branch
          %409 = sbr.rel (%p407) target = $region16
        $region15: #{driving_net_forward.1} parent=11 // pred_region
          _
        $region16: #{driving_net_forward.1} parent=11 // pred_fallthru
          _
        // Predicated region
        $region17: #{driving_net_forward.1} parent=11 // pred_check
          %p410 = pneg %p93
        $region18: #{driving_net_forward.1} parent=11 // pred_check_branch
          %412 = sbr.rel (%p410) target = $region20
        $region19: #{driving_net_forward.1} parent=11 // pred_region
          _
        $region20: #{driving_net_forward.1} parent=11 // pred_fallthru
          _
        // Predicated region
        $region21: #{driving_net_forward.1} parent=11 // pred_check
          %p413 = pneg %p114
        $region22: #{driving_net_forward.1} parent=11 // pred_check_branch
          %415 = sbr.rel (%p413) target = $region24
        $region23: #{driving_net_forward.1} parent=11 // pred_region
          _
        $region24: #{driving_net_forward.1} parent=11 // pred_fallthru
          _
        // Predicated region
        $region25: #{driving_net_forward.1} parent=11 // pred_check
          %p416 = pneg %p135
        $region26: #{driving_net_forward.1} parent=11 // pred_check_branch
          %418 = sbr.rel (%p416) target = $region28
        $region27: #{driving_net_forward.1} parent=11 // pred_region
          _
        $region28: #{driving_net_forward.1} parent=11 // pred_fallthru
          _
        // Predicated region
        $region29: #{driving_net_forward.1} parent=11 // pred_check
          %p419 = pneg %p156
        $region30: #{driving_net_forward.1} parent=11 // pred_check_branch
          %421 = sbr.rel (%p419) target = $region32
        $region31: #{driving_net_forward.1} parent=11 // pred_region
          _
        $region32: #{driving_net_forward.1} parent=11 // pred_fallthru
          _
        // Predicated region
        $region33: #{driving_net_forward.1} parent=11 // pred_check
          %p422 = pneg %p177
        $region34: #{driving_net_forward.1} parent=11 // pred_check_branch
          %424 = sbr.rel (%p422) target = $region36
        $region35: #{driving_net_forward.1} parent=11 // pred_region
          _
        $region36: #{driving_net_forward.1} parent=11 // pred_fallthru
          _
        // Predicated region
        $region37: #{driving_net_forward.1} parent=11 // pred_check
          %p425 = pneg %p198
        $region38: #{driving_net_forward.1} parent=11 // pred_check_branch
          %427 = sbr.rel (%p425) target = $region40
        $region39: #{driving_net_forward.1} parent=11 // pred_region
          _
        $region40: #{driving_net_forward.1} parent=11 // pred_fallthru
          _
        // Predicated region
        $region41: #{driving_net_forward.1} parent=11 // pred_check
          %p428 = pneg %p219
        $region42: #{driving_net_forward.1} parent=11 // pred_check_branch
          %430 = sbr.rel (%p428) target = $region44
        $region43: #{driving_net_forward.1} parent=11 // pred_region
          _
        $region44: #{driving_net_forward.1} parent=11 // pred_fallthru
          _
        // Predicated region
        $region45: #{driving_net_forward.1} parent=11 // pred_check
          %p431 = pneg %p240
        $region46: #{driving_net_forward.1} parent=11 // pred_check_branch
          %433 = sbr.rel (%p431) target = $region48
        $region47: #{driving_net_forward.1} parent=11 // pred_region
          _
        $region48: #{driving_net_forward.1} parent=11 // pred_fallthru
          _
        // Predicated region
        $region49: #{driving_net_forward.1} parent=11 // pred_check
          %p434 = pneg %p261
        $region50: #{driving_net_forward.1} parent=11 // pred_check_branch
          %436 = sbr.rel (%p434) target = $region52
        $region51: #{driving_net_forward.1} parent=11 // pred_region
          _
        $region52: #{driving_net_forward.1} parent=11 // pred_fallthru
          _
        // Predicated region
        $region53: #{driving_net_forward.1} parent=11 // pred_check
          %p437 = pneg %p282
        $region54: #{driving_net_forward.1} parent=11 // pred_check_branch
          %439 = sbr.rel (%p437) target = $region56
        $region55: #{driving_net_forward.1} parent=11 // pred_region
          _
        $region56: #{driving_net_forward.1} parent=11 // pred_fallthru
          _
        // Predicated region
        $region57: #{driving_net_forward.1} parent=11 // pred_check
          %p440 = pneg %p303
        $region58: #{driving_net_forward.1} parent=11 // pred_check_branch
          %442 = sbr.rel (%p440) target = $region60
        $region59: #{driving_net_forward.1} parent=11 // pred_region
          _
        $region60: #{driving_net_forward.1} parent=11 // pred_fallthru
          _
        // Predicated region
        $region61: #{driving_net_forward.1} parent=11 // pred_check
          %p443 = pneg %p324
        $region62: #{driving_net_forward.1} parent=11 // pred_check_branch
          %445 = sbr.rel (%p443) target = $region64
        $region63: #{driving_net_forward.1} parent=11 // pred_region
          _
        $region64: #{driving_net_forward.1} parent=11 // pred_fallthru
          _
        // Predicated region
        $region65: #{driving_net_forward.1} parent=11 // pred_check
          %p446 = pneg %p345
        $region66: #{driving_net_forward.1} parent=11 // pred_check_branch
          %448 = sbr.rel (%p446) target = $region68
        $region67: #{driving_net_forward.1} parent=11 // pred_region
          _
        $region68: #{driving_net_forward.1} parent=11 // pred_fallthru
          _
        // Predicated region
        $region69: #{driving_net_forward.1} parent=11 // pred_check
          %p449 = pneg %p366
        $region70: #{driving_net_forward.1} parent=11 // pred_check_branch
          %451 = sbr.rel (%p449) target = $region72
        $region71: #{driving_net_forward.1} parent=11 // pred_region
          _
        $region72: #{driving_net_forward.1} parent=11 // pred_fallthru
          _
      $region12: #{driving_net_forward.1} parent=5 // pred_fallthru
        _
      %p452 = scmp.lt.s32.totalorder %s25, 2
      // Predicated region
      $region73: #{driving_net_forward.1} parent=5 // pred_check
        %p453 = pneg %p452
      $region74: #{driving_net_forward.1} parent=5 // pred_check_branch
        %455 = sbr.rel (%p453) target = $region76
      $region75: #{driving_net_forward.1} parent=5 // pred_region
        // Predicated region
        $region77: #{driving_net_forward.1} parent=75 // pred_check
          %p456 = pneg %p45
        $region78: #{driving_net_forward.1} parent=75 // pred_check_branch
          %458 = sbr.rel (%p456) target = $region80
        $region79: #{driving_net_forward.1} parent=75 // pred_region
          %p459 = scmp.lt.s32.totalorder %s25, 1
          %s460 = scalar_select %p459, %s25, 1
          %s461 = smul.addr %s460, 4
          %s462 = smul.addr %s461, 4
          %s463 = scalar_lea.vmem %s0, %s462
        $region80: #{driving_net_forward.1} parent=75 // pred_fallthru
          _
      $region76: #{driving_net_forward.1} parent=5 // pred_fallthru
        _
      %p464 = scmp.le.s32.totalorder 1, %s25
      %p465 = scmp.lt.s32.totalorder %s25, 3
      %p466 = pnand %p464, %p465
      %p467 = pneg %p466
      // Predicated region
      $region81: #{driving_net_forward.1} parent=5 // pred_check
        _
      $region82: #{driving_net_forward.1} parent=5 // pred_check_branch
        %469 = sbr.rel (%p466) target = $region84
      $region83: #{driving_net_forward.1} parent=5 // pred_region
        %s470 = ssub.s32 %s25, 1
        %p471 = scmp.lt.s32.totalorder %s30, 1
        %s472 = scalar_select %p471, %s30, 1
        %s473 = smul.addr %s472, 4
        %s474 = smul.addr %s473, 4
        %s475 = scalar_lea.vmem %s0, %s474
        %p476 = pneg %p51
        %p477 = pneg %p48
        %p478 = pneg %p72
        %p479 = pneg %p69
        %p480 = pneg %p93
        %p481 = pneg %p90
        %p482 = pneg %p114
        %p483 = pneg %p111
        %p484 = pneg %p135
        %p485 = pneg %p132
        %p486 = pneg %p156
        %p487 = pneg %p153
        %p488 = pneg %p177
        %p489 = pneg %p174
        %p490 = pneg %p198
        %p491 = pneg %p195
        %p492 = pneg %p219
        %p493 = pneg %p216
        %p494 = pneg %p240
        %p495 = pneg %p237
        %p496 = pneg %p261
        %p497 = pneg %p258
        %p498 = pneg %p282
        %p499 = pneg %p279
        %p500 = pneg %p303
        %p501 = pneg %p300
        %p502 = pneg %p324
        %p503 = pneg %p321
        %p504 = pneg %p345
        %p505 = pneg %p342
        %p506 = pneg %p366
        %p507 = pneg %p363
        %p508 = pneg %p392
        %p509 = pneg %p389
        %s510 = sand.u32 %s379, 1
        %s511 = scalar_lea.sflag [#allocation3], %s510
        %s512 = sand.u32 %s379, 1
        %s513 = scalar_lea.vmem [#allocation2], %s512
        %p514 = scmp.lt.s32.totalorder %s30, 1
        %s515 = scalar_select %p514, %s30, 1
        %s516 = smul.addr %s515, 4
        %s517 = smul.addr %s516, 4
        %s518 = scalar_lea.vmem %s0, %s517
        %v520 = vld [vmem:[%s518] sm:$0xf]
        %v521 = vld [vmem:[%s518 + $0x4] sm:$0xf]
        %v522 = vld [vmem:[%s518 + $0x8] sm:$0xf]
        %v523 = vld [vmem:[%s518 + $0xc] sm:$0xf]
        %v524 = vld [vmem:[%s1] sm:$0xff]
        %v525 = vld [vmem:[%s1 + $0x8] sm:$0xff]
        %v526 = vld [vmem:[%s1 + $0x10] sm:$0xff]
        %v527 = vld [vmem:[%s1 + $0x18] sm:$0xff]
        %v528 = vld [vmem:[%s1 + $0x20] sm:$0xff]
        %v529 = vld [vmem:[%s1 + $0x28] sm:$0xff]
        %v530 = vld [vmem:[%s1 + $0x30] sm:$0xff]
        %v531 = vld [vmem:[%s1 + $0x38] sm:$0xff]
        %v532 = vld [vmem:[%s1 + $0x40] sm:$0xff]
        %v533 = vld [vmem:[%s1 + $0x48] sm:$0xff]
        %v534 = vld [vmem:[%s1 + $0x50] sm:$0xff]
        %v535 = vld [vmem:[%s1 + $0x58] sm:$0xff]
        %s536 = scalar_lea.vmem %s1, 96
        %v537 = vld [vmem:[%s536] sm:$0xff]
        %v538 = vld [vmem:[%s536 + $0x8] sm:$0xff]
        %v539 = vld [vmem:[%s536 + $0x10] sm:$0xff]
        %v540 = vld [vmem:[%s536 + $0x18] sm:$0xff]
        %v541 = vld [vmem:[%s536 + $0x20] sm:$0xff]
        %v542 = vld [vmem:[%s536 + $0x28] sm:$0xff]
        %v543 = vld [vmem:[%s536 + $0x30] sm:$0xff]
        %v544 = vld [vmem:[%s536 + $0x38] sm:$0xff]
        %v545 = vld [vmem:[%s536 + $0x40] sm:$0xff]
        %v546 = vld [vmem:[%s536 + $0x48] sm:$0xff]
        %v547 = vld [vmem:[%s536 + $0x50] sm:$0xff]
        %v548 = vld [vmem:[%s536 + $0x58] sm:$0xff]
        %v553 = vunpack.c.l.b16 %v520
        %v554 = vunpack.c.l.b16 %v521
        %v555 = vunpack.c.l.b16 %v522
        %v556 = vunpack.c.l.b16 %v523
        %v557 = vpack.c.b16 %v554, %v553
        %v558 = vpack.c.b16 %v556, %v555
        %vm559 = vsmask.f32 7424
        %v561 = vshrl.u32 %v557, 16
        %v563 = vshll.u32 %v557, 16
        %v565 = vrot.slane %v563, 1
        %v566 = vor.u32 %v561, %v565
        %v568 = vshll.u32 %v558, 16
        %v570 = vrot.slane %v568, 1
        %v571 = vsel %vm559, %v566, %v570
        %v572 = vshrl.u32 %v558, 16
        %v574 = vor.u32 %v572, %v570
        %v587 = vunpack.c.l.b16 %v537
        %v588 = vunpack.c.h.b16 %v537
        %v589 = vunpack.c.l.b16 %v538
        %v590 = vunpack.c.h.b16 %v538
        %v591 = vunpack.c.l.b16 %v539
        %v592 = vunpack.c.h.b16 %v539
        %v593 = vunpack.c.l.b16 %v540
        %v594 = vunpack.c.h.b16 %v540
        %v595 = vunpack.c.l.b16 %v541
        %v596 = vunpack.c.h.b16 %v541
        %v597 = vunpack.c.l.b16 %v542
        %v598 = vunpack.c.h.b16 %v542
        %v599 = vunpack.c.l.b16 %v543
        %v600 = vunpack.c.h.b16 %v543
        %v601 = vunpack.c.l.b16 %v544
        %v602 = vunpack.c.h.b16 %v544
        %v603 = vunpack.c.l.b16 %v545
        %v604 = vunpack.c.h.b16 %v545
        %v605 = vunpack.c.l.b16 %v546
        %v606 = vunpack.c.h.b16 %v546
        %v607 = vunpack.c.l.b16 %v547
        %v608 = vunpack.c.h.b16 %v547
        %v609 = vunpack.c.l.b16 %v548
        %v610 = vunpack.c.h.b16 %v548
        %v611 = vpack.c.b16 %v589, %v587
        %v612 = vpack.c.b16 %v590, %v588
        %v613 = vpack.c.b16 %v593, %v591
        %v614 = vpack.c.b16 %v594, %v592
        %v615 = vpack.c.b16 %v597, %v595
        %v616 = vpack.c.b16 %v598, %v596
        %v617 = vpack.c.b16 %v601, %v599
        %v618 = vpack.c.b16 %v602, %v600
        %v619 = vpack.c.b16 %v605, %v603
        %v620 = vpack.c.b16 %v606, %v604
        %v621 = vpack.c.b16 %v609, %v607
        %v622 = vpack.c.b16 %v610, %v608
        %vm635 = vcmask 785408
        %v637 = vsel %vm635, %v571, 0
        %v640 = vsel %vm635, %v574, 0
        %642 = vmatprep.subr.bf16.mxu0 %v612
        %643 = vmatpush1.bf16.msra.mxu0 %v611
        %644 = vmatprep.subr.bf16.mxu0 %v614
        %645 = vmatpush1.bf16.msra.mxu0 %v613
        %646 = vmatprep.subr.bf16.mxu0 %v616
        %647 = vmatpush1.bf16.msra.mxu0 %v615
        %648 = vmatprep.subr.bf16.mxu0 %v618
        %649 = vmatpush1.bf16.msra.mxu0 %v617
        %650 = vmatprep.subr.bf16.mxu0 %v620
        %651 = vmatpush1.bf16.msra.mxu0 %v619
        %652 = vmatprep.subr.bf16.mxu0 %v622
        %653 = vmatpush1.bf16.msra.mxu0 %v621
        %654 = vmatprep.subr.bf16.mxu0 0
        %655 = vmatpush1.bf16.msra.mxu0 0
        %656 = vmatprep.subr.bf16.mxu0 0
        %657 = vmatpush1.bf16.msra.mxu0 0
        %658 = vmatprep.subr.bf16.mxu0 0
        %659 = vmatpush1.bf16.msra.mxu0 0
        %660 = vmatprep.subr.bf16.mxu0 0
        %661 = vmatpush1.bf16.msra.mxu0 0
        %662 = vmatprep.subr.bf16.mxu0 0
        %663 = vmatpush1.bf16.msra.mxu0 0
        %664 = vmatprep.subr.bf16.mxu0 0
        %665 = vmatpush1.bf16.msra.mxu0 0
        %666 = vmatprep.subr.bf16.mxu0 0
        %667 = vmatpush1.bf16.msra.mxu0 0
        %668 = vmatprep.subr.bf16.mxu0 0
        %669 = vmatpush1.bf16.msra.mxu0 0
        %670 = vmatprep.subr.bf16.mxu0 0
        %671 = vmatpush1.bf16.msra.mxu0 0
        %672 = vmatprep.subr.bf16.mxu0 0
        %673 = vmatpush1.bf16.msra.mxu0 0
        %674 = vmatprep.mubr.bf16.mxu0 0
        %675 = vmatmul.mubr.bf16.gmra.mrb[0].mxu0 %v637
        %v676 = vpop.f32.mrb[0].mxu0
        %v677 = vadd.f32 0.0, %v676
        %v678 = vpop.f32.mrb[0].mxu0
        %v679 = vadd.f32 0.0, %v678
        %v680 = vpop.f32.mrb[0].mxu0
        %v681 = vadd.f32 0.0, %v680
        %v682 = vpop.f32.mrb[0].mxu0
        %v683 = vadd.f32 0.0, %v682
        %684 = vmatprep.mubr.bf16.mxu0 0
        %685 = vmatmul.mubr.bf16.gmra.mrb[0].mxu0 %v640
        %v686 = vpop.f32.mrb[0].mxu0
        %v687 = vadd.f32 0.0, %v686
        %v688 = vpop.f32.mrb[0].mxu0
        %v689 = vadd.f32 0.0, %v688
        %v690 = vpop.f32.mrb[0].mxu0
        %v691 = vadd.f32 0.0, %v690
        %v692 = vpop.f32.mrb[0].mxu0
        %v693 = vadd.f32 0.0, %v692
        %694 = vdwg.mxu0
        %v707 = vunpack.c.l.b16 %v524
        %v708 = vunpack.c.h.b16 %v524
        %v709 = vunpack.c.l.b16 %v525
        %v710 = vunpack.c.h.b16 %v525
        %v711 = vunpack.c.l.b16 %v526
        %v712 = vunpack.c.h.b16 %v526
        %v713 = vunpack.c.l.b16 %v527
        %v714 = vunpack.c.h.b16 %v527
        %v715 = vunpack.c.l.b16 %v528
        %v716 = vunpack.c.h.b16 %v528
        %v717 = vunpack.c.l.b16 %v529
        %v718 = vunpack.c.h.b16 %v529
        %v719 = vunpack.c.l.b16 %v530
        %v720 = vunpack.c.h.b16 %v530
        %v721 = vunpack.c.l.b16 %v531
        %v722 = vunpack.c.h.b16 %v531
        %v723 = vunpack.c.l.b16 %v532
        %v724 = vunpack.c.h.b16 %v532
        %v725 = vunpack.c.l.b16 %v533
        %v726 = vunpack.c.h.b16 %v533
        %v727 = vunpack.c.l.b16 %v534
        %v728 = vunpack.c.h.b16 %v534
        %v729 = vunpack.c.l.b16 %v535
        %v730 = vunpack.c.h.b16 %v535
        %v731 = vpack.c.b16 %v709, %v707
        %v732 = vpack.c.b16 %v710, %v708
        %v733 = vpack.c.b16 %v713, %v711
        %v734 = vpack.c.b16 %v714, %v712
        %v735 = vpack.c.b16 %v717, %v715
        %v736 = vpack.c.b16 %v718, %v716
        %v737 = vpack.c.b16 %v721, %v719
        %v738 = vpack.c.b16 %v722, %v720
        %v739 = vpack.c.b16 %v725, %v723
        %v740 = vpack.c.b16 %v726, %v724
        %v741 = vpack.c.b16 %v729, %v727
        %v742 = vpack.c.b16 %v730, %v728
        %v755 = vsel %vm635, %v557, 0
        %v757 = vsel %vm635, %v558, 0
        %759 = vmatprep.subr.bf16.mxu0 %v732
        %760 = vmatpush1.bf16.msra.mxu0 %v731
        %761 = vmatprep.subr.bf16.mxu0 %v734
        %762 = vmatpush1.bf16.msra.mxu0 %v733
        %763 = vmatprep.subr.bf16.mxu0 %v736
        %764 = vmatpush1.bf16.msra.mxu0 %v735
        %765 = vmatprep.subr.bf16.mxu0 %v738
        %766 = vmatpush1.bf16.msra.mxu0 %v737
        %767 = vmatprep.subr.bf16.mxu0 %v740
        %768 = vmatpush1.bf16.msra.mxu0 %v739
        %769 = vmatprep.subr.bf16.mxu0 %v742
        %770 = vmatpush1.bf16.msra.mxu0 %v741
        %771 = vmatprep.subr.bf16.mxu0 0
        %772 = vmatpush1.bf16.msra.mxu0 0
        %773 = vmatprep.subr.bf16.mxu0 0
        %774 = vmatpush1.bf16.msra.mxu0 0
        %775 = vmatprep.subr.bf16.mxu0 0
        %776 = vmatpush1.bf16.msra.mxu0 0
        %777 = vmatprep.subr.bf16.mxu0 0
        %778 = vmatpush1.bf16.msra.mxu0 0
        %779 = vmatprep.subr.bf16.mxu0 0
        %780 = vmatpush1.bf16.msra.mxu0 0
        %781 = vmatprep.subr.bf16.mxu0 0
        %782 = vmatpush1.bf16.msra.mxu0 0
        %783 = vmatprep.subr.bf16.mxu0 0
        %784 = vmatpush1.bf16.msra.mxu0 0
        %785 = vmatprep.subr.bf16.mxu0 0
        %786 = vmatpush1.bf16.msra.mxu0 0
        %787 = vmatprep.subr.bf16.mxu0 0
        %788 = vmatpush1.bf16.msra.mxu0 0
        %789 = vmatprep.subr.bf16.mxu0 0
        %790 = vmatpush1.bf16.msra.mxu0 0
        %791 = vmatprep.mubr.bf16.mxu0 0
        %792 = vmatmul.mubr.bf16.gmra.mrb[0].mxu0 %v755
        %v793 = vpop.f32.mrb[0].mxu0
        %v794 = vadd.f32 %v677, %v793
        %v795 = vpop.f32.mrb[0].mxu0
        %v796 = vadd.f32 %v679, %v795
        %v797 = vpop.f32.mrb[0].mxu0
        %v798 = vadd.f32 %v681, %v797
        %v799 = vpop.f32.mrb[0].mxu0
        %v800 = vadd.f32 %v683, %v799
        %801 = vmatprep.mubr.bf16.mxu0 0
        %802 = vmatmul.mubr.bf16.gmra.mrb[0].mxu0 %v757
        %v803 = vpop.f32.mrb[0].mxu0
        %v804 = vadd.f32 %v687, %v803
        %v805 = vpop.f32.mrb[0].mxu0
        %v806 = vadd.f32 %v689, %v805
        %v807 = vpop.f32.mrb[0].mxu0
        %v808 = vadd.f32 %v691, %v807
        %v809 = vpop.f32.mrb[0].mxu0
        %v810 = vadd.f32 %v693, %v809
        %811 = vdwg.mxu0
        %s812 = scalar_lea.vmem %s1, 192
        %v813 = vld [vmem:[%s812] sm:$0xff]
        %v814 = vld [vmem:[%s812 + $0x8] sm:$0xff]
        %v815 = vld [vmem:[%s812 + $0x10] sm:$0xff]
        %v816 = vld [vmem:[%s812 + $0x18] sm:$0xff]
        %v817 = vld [vmem:[%s812 + $0x20] sm:$0xff]
        %v818 = vld [vmem:[%s812 + $0x28] sm:$0xff]
        %v819 = vld [vmem:[%s812 + $0x30] sm:$0xff]
        %v820 = vld [vmem:[%s812 + $0x38] sm:$0xff]
        %v821 = vld [vmem:[%s812 + $0x40] sm:$0xff]
        %v822 = vld [vmem:[%s812 + $0x48] sm:$0xff]
        %v823 = vld [vmem:[%s812 + $0x50] sm:$0xff]
        %v824 = vld [vmem:[%s812 + $0x58] sm:$0xff]
        %vm825 = vcmask 1046528
        %v826 = vrot.slane %v557, 1
        %v827 = vrot.slane %v558, 1
        %v828 = vsel %vm825, %v826, %v827
        %v841 = vunpack.c.l.b16 %v813
        %v842 = vunpack.c.h.b16 %v813
        %v843 = vunpack.c.l.b16 %v814
        %v844 = vunpack.c.h.b16 %v814
        %v845 = vunpack.c.l.b16 %v815
        %v846 = vunpack.c.h.b16 %v815
        %v847 = vunpack.c.l.b16 %v816
        %v848 = vunpack.c.h.b16 %v816
        %v849 = vunpack.c.l.b16 %v817
        %v850 = vunpack.c.h.b16 %v817
        %v851 = vunpack.c.l.b16 %v818
        %v852 = vunpack.c.h.b16 %v818
        %v853 = vunpack.c.l.b16 %v819
        %v854 = vunpack.c.h.b16 %v819
        %v855 = vunpack.c.l.b16 %v820
        %v856 = vunpack.c.h.b16 %v820
        %v857 = vunpack.c.l.b16 %v821
        %v858 = vunpack.c.h.b16 %v821
        %v859 = vunpack.c.l.b16 %v822
        %v860 = vunpack.c.h.b16 %v822
        %v861 = vunpack.c.l.b16 %v823
        %v862 = vunpack.c.h.b16 %v823
        %v863 = vunpack.c.l.b16 %v824
        %v864 = vunpack.c.h.b16 %v824
        %v865 = vpack.c.b16 %v843, %v841
        %v866 = vpack.c.b16 %v844, %v842
        %v867 = vpack.c.b16 %v847, %v845
        %v868 = vpack.c.b16 %v848, %v846
        %v869 = vpack.c.b16 %v851, %v849
        %v870 = vpack.c.b16 %v852, %v850
        %v871 = vpack.c.b16 %v855, %v853
        %v872 = vpack.c.b16 %v856, %v854
        %v873 = vpack.c.b16 %v859, %v857
        %v874 = vpack.c.b16 %v860, %v858
        %v875 = vpack.c.b16 %v863, %v861
        %v876 = vpack.c.b16 %v864, %v862
        %v890 = vsel %vm635, %v828, 0
        %v893 = vsel %vm635, %v827, 0
        %895 = vmatprep.subr.bf16.mxu0 %v866
        %896 = vmatpush1.bf16.msra.mxu0 %v865
        %897 = vmatprep.subr.bf16.mxu0 %v868
        %898 = vmatpush1.bf16.msra.mxu0 %v867
        %899 = vmatprep.subr.bf16.mxu0 %v870
        %900 = vmatpush1.bf16.msra.mxu0 %v869
        %901 = vmatprep.subr.bf16.mxu0 %v872
        %902 = vmatpush1.bf16.msra.mxu0 %v871
        %903 = vmatprep.subr.bf16.mxu0 %v874
        %904 = vmatpush1.bf16.msra.mxu0 %v873
        %905 = vmatprep.subr.bf16.mxu0 %v876
        %906 = vmatpush1.bf16.msra.mxu0 %v875
        %907 = vmatprep.subr.bf16.mxu0 0
        %908 = vmatpush1.bf16.msra.mxu0 0
        %909 = vmatprep.subr.bf16.mxu0 0
        %910 = vmatpush1.bf16.msra.mxu0 0
        %911 = vmatprep.subr.bf16.mxu0 0
        %912 = vmatpush1.bf16.msra.mxu0 0
        %913 = vmatprep.subr.bf16.mxu0 0
        %914 = vmatpush1.bf16.msra.mxu0 0
        %915 = vmatprep.subr.bf16.mxu0 0
        %916 = vmatpush1.bf16.msra.mxu0 0
        %917 = vmatprep.subr.bf16.mxu0 0
        %918 = vmatpush1.bf16.msra.mxu0 0
        %919 = vmatprep.subr.bf16.mxu0 0
        %920 = vmatpush1.bf16.msra.mxu0 0
        %921 = vmatprep.subr.bf16.mxu0 0
        %922 = vmatpush1.bf16.msra.mxu0 0
        %923 = vmatprep.subr.bf16.mxu0 0
        %924 = vmatpush1.bf16.msra.mxu0 0
        %925 = vmatprep.subr.bf16.mxu0 0
        %926 = vmatpush1.bf16.msra.mxu0 0
        %927 = vmatprep.mubr.bf16.mxu0 0
        %928 = vmatmul.mubr.bf16.gmra.mrb[0].mxu0 %v890
        %v929 = vpop.f32.mrb[0].mxu0
        %v930 = vadd.f32 0.0, %v929
        %v931 = vpop.f32.mrb[0].mxu0
        %v932 = vadd.f32 0.0, %v931
        %v933 = vpop.f32.mrb[0].mxu0
        %v934 = vadd.f32 0.0, %v933
        %v935 = vpop.f32.mrb[0].mxu0
        %v936 = vadd.f32 0.0, %v935
        %937 = vmatprep.mubr.bf16.mxu0 0
        %938 = vmatmul.mubr.bf16.gmra.mrb[0].mxu0 %v893
        %v939 = vpop.f32.mrb[0].mxu0
        %v940 = vadd.f32 0.0, %v939
        %v941 = vpop.f32.mrb[0].mxu0
        %v942 = vadd.f32 0.0, %v941
        %v943 = vpop.f32.mrb[0].mxu0
        %v944 = vadd.f32 0.0, %v943
        %v945 = vpop.f32.mrb[0].mxu0
        %v946 = vadd.f32 0.0, %v945
        %947 = vdwg.mxu0
        %v948 = vadd.f32 %v794, %v930
        %v949 = vadd.f32 %v796, %v932
        %v950 = vadd.f32 %v798, %v934
        %v951 = vadd.f32 %v800, %v936
        %v952 = vadd.f32 %v804, %v940
        %v953 = vadd.f32 %v806, %v942
        %v954 = vadd.f32 %v808, %v944
        %v955 = vadd.f32 %v810, %v946
        %s956 = scalar_lea.vmem %s1, 288
        %v957 = vld [vmem:[%s956] sm:$0xff]
        %v958 = vld [vmem:[%s956 + $0x8] sm:$0xff]
        %v959 = vld [vmem:[%s956 + $0x10] sm:$0xff]
        %v960 = vld [vmem:[%s956 + $0x18] sm:$0xff]
        %v961 = vld [vmem:[%s956 + $0x20] sm:$0xff]
        %v962 = vld [vmem:[%s956 + $0x28] sm:$0xff]
        %v963 = vld [vmem:[%s956 + $0x30] sm:$0xff]
        %v964 = vld [vmem:[%s956 + $0x38] sm:$0xff]
        %v965 = vld [vmem:[%s956 + $0x40] sm:$0xff]
        %v966 = vld [vmem:[%s956 + $0x48] sm:$0xff]
        %v967 = vld [vmem:[%s956 + $0x50] sm:$0xff]
        %v968 = vld [vmem:[%s956 + $0x58] sm:$0xff]
        %vm969 = vsmask.f32 6400
        %v970 = vrot.slane %v561, 1
        %v971 = vrot.slane %v563, 2
        %v972 = vor.u32 %v970, %v971
        %v973 = vrot.slane %v572, 1
        %v974 = vrot.slane %v568, 2
        %v975 = vor.u32 %v973, %v974
        %v976 = vsel %vm969, %v972, %v975
        %v989 = vunpack.c.l.b16 %v957
        %v990 = vunpack.c.h.b16 %v957
        %v991 = vunpack.c.l.b16 %v958
        %v992 = vunpack.c.h.b16 %v958
        %v993 = vunpack.c.l.b16 %v959
        %v994 = vunpack.c.h.b16 %v959
        %v995 = vunpack.c.l.b16 %v960
        %v996 = vunpack.c.h.b16 %v960
        %v997 = vunpack.c.l.b16 %v961
        %v998 = vunpack.c.h.b16 %v961
        %v999 = vunpack.c.l.b16 %v962
        %v1000 = vunpack.c.h.b16 %v962
        %v1001 = vunpack.c.l.b16 %v963
        %v1002 = vunpack.c.h.b16 %v963
        %v1003 = vunpack.c.l.b16 %v964
        %v1004 = vunpack.c.h.b16 %v964
        %v1005 = vunpack.c.l.b16 %v965
        %v1006 = vunpack.c.h.b16 %v965
        %v1007 = vunpack.c.l.b16 %v966
        %v1008 = vunpack.c.h.b16 %v966
        %v1009 = vunpack.c.l.b16 %v967
        %v1010 = vunpack.c.h.b16 %v967
        %v1011 = vunpack.c.l.b16 %v968
        %v1012 = vunpack.c.h.b16 %v968
        %v1013 = vpack.c.b16 %v991, %v989
        %v1014 = vpack.c.b16 %v992, %v990
        %v1015 = vpack.c.b16 %v995, %v993
        %v1016 = vpack.c.b16 %v996, %v994
        %v1017 = vpack.c.b16 %v999, %v997
        %v1018 = vpack.c.b16 %v1000, %v998
        %v1019 = vpack.c.b16 %v1003, %v1001
        %v1020 = vpack.c.b16 %v1004, %v1002
        %v1021 = vpack.c.b16 %v1007, %v1005
        %v1022 = vpack.c.b16 %v1008, %v1006
        %v1023 = vpack.c.b16 %v1011, %v1009
        %v1024 = vpack.c.b16 %v1012, %v1010
        %v1038 = vsel %vm635, %v976, 0
        %v1041 = vsel %vm635, %v975, 0
        %1043 = vmatprep.subr.bf16.mxu0 %v1014
        %1044 = vmatpush1.bf16.msra.mxu0 %v1013
        %1045 = vmatprep.subr.bf16.mxu0 %v1016
        %1046 = vmatpush1.bf16.msra.mxu0 %v1015
        %1047 = vmatprep.subr.bf16.mxu0 %v1018
        %1048 = vmatpush1.bf16.msra.mxu0 %v1017
        %1049 = vmatprep.subr.bf16.mxu0 %v1020
        %1050 = vmatpush1.bf16.msra.mxu0 %v1019
        %1051 = vmatprep.subr.bf16.mxu0 %v1022
        %1052 = vmatpush1.bf16.msra.mxu0 %v1021
        %1053 = vmatprep.subr.bf16.mxu0 %v1024
        %1054 = vmatpush1.bf16.msra.mxu0 %v1023
        %1055 = vmatprep.subr.bf16.mxu0 0
        %1056 = vmatpush1.bf16.msra.mxu0 0
        %1057 = vmatprep.subr.bf16.mxu0 0
        %1058 = vmatpush1.bf16.msra.mxu0 0
        %1059 = vmatprep.subr.bf16.mxu0 0
        %1060 = vmatpush1.bf16.msra.mxu0 0
        %1061 = vmatprep.subr.bf16.mxu0 0
        %1062 = vmatpush1.bf16.msra.mxu0 0
        %1063 = vmatprep.subr.bf16.mxu0 0
        %1064 = vmatpush1.bf16.msra.mxu0 0
        %1065 = vmatprep.subr.bf16.mxu0 0
        %1066 = vmatpush1.bf16.msra.mxu0 0
        %1067 = vmatprep.subr.bf16.mxu0 0
        %1068 = vmatpush1.bf16.msra.mxu0 0
        %1069 = vmatprep.subr.bf16.mxu0 0
        %1070 = vmatpush1.bf16.msra.mxu0 0
        %1071 = vmatprep.subr.bf16.mxu0 0
        %1072 = vmatpush1.bf16.msra.mxu0 0
        %1073 = vmatprep.subr.bf16.mxu0 0
        %1074 = vmatpush1.bf16.msra.mxu0 0
        %1075 = vmatprep.mubr.bf16.mxu0 0
        %1076 = vmatmul.mubr.bf16.gmra.mrb[0].mxu0 %v1038
        %v1077 = vpop.f32.mrb[0].mxu0
        %v1078 = vadd.f32 0.0, %v1077
        %v1079 = vpop.f32.mrb[0].mxu0
        %v1080 = vadd.f32 0.0, %v1079
        %v1081 = vpop.f32.mrb[0].mxu0
        %v1082 = vadd.f32 0.0, %v1081
        %v1083 = vpop.f32.mrb[0].mxu0
        %v1084 = vadd.f32 0.0, %v1083
        %1085 = vmatprep.mubr.bf16.mxu0 0
        %1086 = vmatmul.mubr.bf16.gmra.mrb[0].mxu0 %v1041
        %v1087 = vpop.f32.mrb[0].mxu0
        %v1088 = vadd.f32 0.0, %v1087
        %v1089 = vpop.f32.mrb[0].mxu0
        %v1090 = vadd.f32 0.0, %v1089
        %v1091 = vpop.f32.mrb[0].mxu0
        %v1092 = vadd.f32 0.0, %v1091
        %v1093 = vpop.f32.mrb[0].mxu0
        %v1094 = vadd.f32 0.0, %v1093
        %1095 = vdwg.mxu0
        %v1096 = vadd.f32 %v948, %v1078
        %v1097 = vadd.f32 %v949, %v1080
        %v1098 = vadd.f32 %v950, %v1082
        %v1099 = vadd.f32 %v951, %v1084
        %v1100 = vadd.f32 %v952, %v1088
        %v1101 = vadd.f32 %v953, %v1090
        %v1102 = vadd.f32 %v954, %v1092
        %v1103 = vadd.f32 %v955, %v1094
        %s1104 = scalar_lea.vmem %s1, 384
        %v1105 = vld [vmem:[%s1104] sm:$0xff]
        %v1106 = vld [vmem:[%s1104 + $0x8] sm:$0xff]
        %v1107 = vld [vmem:[%s1104 + $0x10] sm:$0xff]
        %v1108 = vld [vmem:[%s1104 + $0x18] sm:$0xff]
        %v1109 = vld [vmem:[%s1104 + $0x20] sm:$0xff]
        %v1110 = vld [vmem:[%s1104 + $0x28] sm:$0xff]
        %v1111 = vld [vmem:[%s1104 + $0x30] sm:$0xff]
        %v1112 = vld [vmem:[%s1104 + $0x38] sm:$0xff]
        %v1113 = vld [vmem:[%s1104 + $0x40] sm:$0xff]
        %v1114 = vld [vmem:[%s1104 + $0x48] sm:$0xff]
        %v1115 = vld [vmem:[%s1104 + $0x50] sm:$0xff]
        %v1116 = vld [vmem:[%s1104 + $0x58] sm:$0xff]
        %vm1117 = vcmask 1045504
        %v1118 = vrot.slane %v557, 2
        %v1119 = vrot.slane %v558, 2
        %v1120 = vsel %vm1117, %v1118, %v1119
        %v1133 = vunpack.c.l.b16 %v1105
        %v1134 = vunpack.c.h.b16 %v1105
        %v1135 = vunpack.c.l.b16 %v1106
        %v1136 = vunpack.c.h.b16 %v1106
        %v1137 = vunpack.c.l.b16 %v1107
        %v1138 = vunpack.c.h.b16 %v1107
        %v1139 = vunpack.c.l.b16 %v1108
        %v1140 = vunpack.c.h.b16 %v1108
        %v1141 = vunpack.c.l.b16 %v1109
        %v1142 = vunpack.c.h.b16 %v1109
        %v1143 = vunpack.c.l.b16 %v1110
        %v1144 = vunpack.c.h.b16 %v1110
        %v1145 = vunpack.c.l.b16 %v1111
        %v1146 = vunpack.c.h.b16 %v1111
        %v1147 = vunpack.c.l.b16 %v1112
        %v1148 = vunpack.c.h.b16 %v1112
        %v1149 = vunpack.c.l.b16 %v1113
        %v1150 = vunpack.c.h.b16 %v1113
        %v1151 = vunpack.c.l.b16 %v1114
        %v1152 = vunpack.c.h.b16 %v1114
        %v1153 = vunpack.c.l.b16 %v1115
        %v1154 = vunpack.c.h.b16 %v1115
        %v1155 = vunpack.c.l.b16 %v1116
        %v1156 = vunpack.c.h.b16 %v1116
        %v1157 = vpack.c.b16 %v1135, %v1133
        %v1158 = vpack.c.b16 %v1136, %v1134
        %v1159 = vpack.c.b16 %v1139, %v1137
        %v1160 = vpack.c.b16 %v1140, %v1138
        %v1161 = vpack.c.b16 %v1143, %v1141
        %v1162 = vpack.c.b16 %v1144, %v1142
        %v1163 = vpack.c.b16 %v1147, %v1145
        %v1164 = vpack.c.b16 %v1148, %v1146
        %v1165 = vpack.c.b16 %v1151, %v1149
        %v1166 = vpack.c.b16 %v1152, %v1150
        %v1167 = vpack.c.b16 %v1155, %v1153
        %v1168 = vpack.c.b16 %v1156, %v1154
        %v1182 = vsel %vm635, %v1120, 0
        %v1185 = vsel %vm635, %v1119, 0
        %1187 = vmatprep.subr.bf16.mxu0 %v1158
        %1188 = vmatpush1.bf16.msra.mxu0 %v1157
        %1189 = vmatprep.subr.bf16.mxu0 %v1160
        %1190 = vmatpush1.bf16.msra.mxu0 %v1159
        %1191 = vmatprep.subr.bf16.mxu0 %v1162
        %1192 = vmatpush1.bf16.msra.mxu0 %v1161
        %1193 = vmatprep.subr.bf16.mxu0 %v1164
        %1194 = vmatpush1.bf16.msra.mxu0 %v1163
        %1195 = vmatprep.subr.bf16.mxu0 %v1166
        %1196 = vmatpush1.bf16.msra.mxu0 %v1165
        %1197 = vmatprep.subr.bf16.mxu0 %v1168
        %1198 = vmatpush1.bf16.msra.mxu0 %v1167
        %1199 = vmatprep.subr.bf16.mxu0 0
        %1200 = vmatpush1.bf16.msra.mxu0 0
        %1201 = vmatprep.subr.bf16.mxu0 0
        %1202 = vmatpush1.bf16.msra.mxu0 0
        %1203 = vmatprep.subr.bf16.mxu0 0
        %1204 = vmatpush1.bf16.msra.mxu0 0
        %1205 = vmatprep.subr.bf16.mxu0 0
        %1206 = vmatpush1.bf16.msra.mxu0 0
        %1207 = vmatprep.subr.bf16.mxu0 0
        %1208 = vmatpush1.bf16.msra.mxu0 0
        %1209 = vmatprep.subr.bf16.mxu0 0
        %1210 = vmatpush1.bf16.msra.mxu0 0
        %1211 = vmatprep.subr.bf16.mxu0 0
        %1212 = vmatpush1.bf16.msra.mxu0 0
        %1213 = vmatprep.subr.bf16.mxu0 0
        %1214 = vmatpush1.bf16.msra.mxu0 0
        %1215 = vmatprep.subr.bf16.mxu0 0
        %1216 = vmatpush1.bf16.msra.mxu0 0
        %1217 = vmatprep.subr.bf16.mxu0 0
        %1218 = vmatpush1.bf16.msra.mxu0 0
        %1219 = vmatprep.mubr.bf16.mxu0 0
        %1220 = vmatmul.mubr.bf16.gmra.mrb[0].mxu0 %v1182
        %v1221 = vpop.f32.mrb[0].mxu0
        %v1222 = vadd.f32 0.0, %v1221
        %v1223 = vpop.f32.mrb[0].mxu0
        %v1224 = vadd.f32 0.0, %v1223
        %v1225 = vpop.f32.mrb[0].mxu0
        %v1226 = vadd.f32 0.0, %v1225
        %v1227 = vpop.f32.mrb[0].mxu0
        %v1228 = vadd.f32 0.0, %v1227
        %1229 = vmatprep.mubr.bf16.mxu0 0
        %1230 = vmatmul.mubr.bf16.gmra.mrb[0].mxu0 %v1185
        %v1231 = vpop.f32.mrb[0].mxu0
        %v1232 = vadd.f32 0.0, %v1231
        %v1233 = vpop.f32.mrb[0].mxu0
        %v1234 = vadd.f32 0.0, %v1233
        %v1235 = vpop.f32.mrb[0].mxu0
        %v1236 = vadd.f32 0.0, %v1235
        %v1237 = vpop.f32.mrb[0].mxu0
        %v1238 = vadd.f32 0.0, %v1237
        %1239 = vdwg.mxu0
        %v1240 = vadd.f32 %v1096, %v1222
        %v1241 = vadd.f32 %v1097, %v1224
        %v1242 = vadd.f32 %v1098, %v1226
        %v1243 = vadd.f32 %v1099, %v1228
        %v1244 = vadd.f32 %v1100, %v1232
        %v1245 = vadd.f32 %v1101, %v1234
        %v1246 = vadd.f32 %v1102, %v1236
        %v1247 = vadd.f32 %v1103, %v1238
        %1256 = vrot.lane.b32.xlu0 %v1240, 16
        %v1257 = vpop.permute.xlu0 %1256
        %1258 = vrot.lane.b32.xlu0 %v1241, 16
        %v1259 = vpop.permute.xlu0 %1258
        %1260 = vrot.lane.b32.xlu0 %v1242, 16
        %v1261 = vpop.permute.xlu0 %1260
        %1262 = vrot.lane.b32.xlu0 %v1243, 16
        %v1263 = vpop.permute.xlu0 %1262
        %1264 = vrot.lane.b32.xlu0 %v1244, 16
        %v1265 = vpop.permute.xlu0 %1264
        %1266 = vrot.lane.b32.xlu0 %v1245, 16
        %v1267 = vpop.permute.xlu0 %1266
        %1268 = vrot.lane.b32.xlu0 %v1246, 16
        %v1269 = vpop.permute.xlu0 %1268
        %1270 = vrot.lane.b32.xlu0 %v1247, 16
        %v1271 = vpop.permute.xlu0 %1270
        %vm1272 = vcmask 130048
        %v1273 = vsel %vm1272, %v1257, %v1259
        %v1274 = vsel %vm1272, %v1261, %v1263
        %v1275 = vsel %vm1272, %v1265, %v1267
        %v1276 = vsel %vm1272, %v1269, %v1271
        %v1281 = vmax.f32 %v1240, %v1273
        %v1282 = vmax.f32 %v1242, %v1274
        %v1283 = vmax.f32 %v1244, %v1275
        %v1284 = vmax.f32 %v1246, %v1276
        %v1285 = vld [vmem:[%s2] sm:$0xff]
        %v1286 = vld [vmem:[%s2 + $0x8] sm:$0xff]
        %v1287 = vld [vmem:[%s2 + $0x10] sm:$0xff]
        %v1288 = vld [vmem:[%s2 + $0x18] sm:$0xf]
        %vm1289 = vcmask 228352
        %v1291 = vsel %vm1289, %v1285, 0
        %v1294 = vsel %vm1289, %v1286, 0
        %v1297 = vsel %vm1289, %v1287, 0
        %v1300 = vsel %vm1289, %v1288, 0
        %vm1302 = vcmask 1043456
        %v1304 = vsel %vm1302, %v1284, 0
        %1306 = vmatprep.subr.mxu0 0.0
        %1307 = vmatpush1.msra.mxu0 %v1281
        %1308 = vmatprep.subr.mxu0 0.0
        %1309 = vmatpush1.msra.mxu0 %v1282
        %1310 = vmatprep.subr.mxu0 0.0
        %1311 = vmatpush1.msra.mxu0 %v1283
        %1312 = vmatprep.subr.mxu0 0.0
        %1313 = vmatpush1.msra.mxu0 %v1304
        %1314 = vmatprep.subr.mxu0 0.0
        %1315 = vmatpush1.msra.mxu0 0.0
        %1316 = vmatprep.subr.mxu0 0.0
        %1317 = vmatpush1.msra.mxu0 0.0
        %1318 = vmatprep.subr.mxu0 0.0
        %1319 = vmatpush1.msra.mxu0 0.0
        %1320 = vmatprep.subr.mxu0 0.0
        %1321 = vmatpush1.msra.mxu0 0.0
        %1322 = vmatprep.subr.mxu0 0.0
        %1323 = vmatpush1.msra.mxu0 0.0
        %1324 = vmatprep.subr.mxu0 0.0
        %1325 = vmatpush1.msra.mxu0 0.0
        %1326 = vmatprep.subr.mxu0 0.0
        %1327 = vmatpush1.msra.mxu0 0.0
        %1328 = vmatprep.subr.mxu0 0.0
        %1329 = vmatpush1.msra.mxu0 0.0
        %1330 = vmatprep.subr.mxu0 0.0
        %1331 = vmatpush1.msra.mxu0 0.0
        %1332 = vmatprep.subr.mxu0 0.0
        %1333 = vmatpush1.msra.mxu0 0.0
        %1334 = vmatprep.subr.mxu0 0.0
        %1335 = vmatpush1.msra.mxu0 0.0
        %1336 = vmatprep.subr.mxu0 0.0
        %1337 = vmatpush1.msra.mxu0 0.0
        %1338 = vmatprep.subr.mxu0 0.0
        %1339 = vmatpush1.msra.mxu0 0.0
        %1340 = vmatprep.subr.mxu0 0.0
        %1341 = vmatpush1.msra.mxu0 0.0
        %1342 = vmatprep.subr.mxu0 0.0
        %1343 = vmatpush1.msra.mxu0 0.0
        %1344 = vmatprep.subr.mxu0 0.0
        %1345 = vmatpush1.msra.mxu0 0.0
        %1346 = vmatprep.subr.mxu0 0.0
        %1347 = vmatpush1.msra.mxu0 0.0
        %1348 = vmatprep.subr.mxu0 0.0
        %1349 = vmatpush1.msra.mxu0 0.0
        %1350 = vmatprep.subr.mxu0 0.0
        %1351 = vmatpush1.msra.mxu0 0.0
        %1352 = vmatprep.subr.mxu0 0.0
        %1353 = vmatpush1.msra.mxu0 0.0
        %1354 = vmatprep.subr.mxu0 0.0
        %1355 = vmatpush1.msra.mxu0 0.0
        %1356 = vmatprep.subr.mxu0 0.0
        %1357 = vmatpush1.msra.mxu0 0.0
        %1358 = vmatprep.subr.mxu0 0.0
        %1359 = vmatpush1.msra.mxu0 0.0
        %1360 = vmatprep.subr.mxu0 0.0
        %1361 = vmatpush1.msra.mxu0 0.0
        %1362 = vmatprep.subr.mxu0 0.0
        %1363 = vmatpush1.msra.mxu0 0.0
        %1364 = vmatprep.subr.mxu0 0.0
        %1365 = vmatpush1.msra.mxu0 0.0
        %1366 = vmatprep.subr.mxu0 0.0
        %1367 = vmatpush1.msra.mxu0 0.0
        %1368 = vmatprep.subr.mxu0 0.0
        %1369 = vmatpush1.msra.mxu0 0.0
        %1370 = vmatprep.mubr.f32.mxu0 0.0
        %1371 = vmatmul.mubr.f32.gmra.mrb[0].mxu0 %v1291
        %v1372 = vpop.f32.mrb[0].mxu0
        %v1373 = vadd.f32 0.0, %v1372
        %v1374 = vpop.f32.mrb[0].mxu0
        %1375 = vmatprep.mubr.f32.mxu0 0.0
        %1376 = vmatmul.mubr.f32.gmra.mrb[0].mxu0 %v1294
        %v1377 = vpop.f32.mrb[0].mxu0
        %v1378 = vadd.f32 0.0, %v1377
        %v1379 = vpop.f32.mrb[0].mxu0
        %1380 = vmatprep.mubr.f32.mxu0 0.0
        %1381 = vmatmul.mubr.f32.gmra.mrb[0].mxu0 %v1297
        %v1382 = vpop.f32.mrb[0].mxu0
        %v1383 = vadd.f32 0.0, %v1382
        %v1384 = vpop.f32.mrb[0].mxu0
        %1385 = vmatprep.mubr.f32.mxu0 0.0
        %1386 = vmatmul.mubr.f32.gmra.mrb[0].mxu0 %v1300
        %v1387 = vpop.f32.mrb[0].mxu0
        %v1388 = vadd.f32 0.0, %v1387
        %v1389 = vpop.f32.mrb[0].mxu0
        %1390 = vdwg.mxu0
        %vm1394 = vcmask 1041408
        %v1395 = vrot.slane %v1378, 6
        %v1396 = vrot.slane %v1383, 6
        %v1397 = vsel %vm1394, %v1395, %v1396
        %v1398 = vrot.slane %v1388, 6
        %v1399 = vsel %vm1394, %v1396, %v1398
        %v1402 = vmax.f32 %v1373, %v1397
        %v1403 = vmax.f32 %v1378, %v1399
        %v1404 = vld [vmem:[%s3] sm:$0x1]
        %v1406 = vlaneseq
        %v1407 = vshrl.u32 %v1406, 7
        %v1408 = vsub.s32 0, %v1407
        %v1409 = vrot.slane %v1404, %v1408
        %v1411 = vadd.f32 %v1402, %v1409
        %v1412 = vadd.f32 %v1403, %v1409
        %v1413 = vmax.f32 %v1411, 0.0
        %v1414 = vmax.f32 %v1412, 0.0
        %v1415 = vpack.c.bf16 %v1414, %v1413
        %v1416 = vld [vmem:[%s4] sm:$0xff]
        %v1417 = vld [vmem:[%s4 + $0x8] sm:$0xff]
        %v1418 = vld [vmem:[%s4 + $0x10] sm:$0xff]
        %v1419 = vld [vmem:[%s4 + $0x18] sm:$0xff]
        %v1420 = vld [vmem:[%s4 + $0x20] sm:$0xff]
        %v1421 = vld [vmem:[%s4 + $0x28] sm:$0xff]
        %v1422 = vld [vmem:[%s4 + $0x30] sm:$0xff]
        %v1423 = vld [vmem:[%s4 + $0x38] sm:$0xff]
        %v1424 = vld [vmem:[%s4 + $0x40] sm:$0xff]
        %v1425 = vld [vmem:[%s4 + $0x48] sm:$0xff]
        %v1426 = vld [vmem:[%s4 + $0x50] sm:$0xff]
        %v1427 = vld [vmem:[%s4 + $0x58] sm:$0xff]
        %v1428 = vld [vmem:[%s4 + $0x60] sm:$0xff]
        %v1429 = vld [vmem:[%s4 + $0x68] sm:$0xff]
        %s1430 = scalar_lea.vmem %s4, 112
        %v1431 = vld [vmem:[%s1430] sm:$0xff]
        %v1432 = vld [vmem:[%s1430 + $0x8] sm:$0xff]
        %v1433 = vld [vmem:[%s1430 + $0x10] sm:$0xff]
        %v1434 = vld [vmem:[%s1430 + $0x18] sm:$0xff]
        %v1435 = vld [vmem:[%s1430 + $0x20] sm:$0xff]
        %v1436 = vld [vmem:[%s1430 + $0x28] sm:$0xff]
        %v1437 = vld [vmem:[%s1430 + $0x30] sm:$0xff]
        %v1438 = vld [vmem:[%s1430 + $0x38] sm:$0xff]
        %v1439 = vld [vmem:[%s1430 + $0x40] sm:$0xff]
        %v1440 = vld [vmem:[%s1430 + $0x48] sm:$0xff]
        %v1441 = vld [vmem:[%s1430 + $0x50] sm:$0xff]
        %v1442 = vld [vmem:[%s1430 + $0x58] sm:$0xff]
        %v1443 = vld [vmem:[%s1430 + $0x60] sm:$0xff]
        %v1444 = vld [vmem:[%s1430 + $0x68] sm:$0xff]
        %v1446 = vshrl.u32 %v1415, 16
        %v1448 = vshll.u32 %v1415, 16
        %v1450 = vrot.slane %v1448, 1
        %v1451 = vor.u32 %v1446, %v1450
        %v1466 = vunpack.c.l.b16 %v1431
        %v1467 = vunpack.c.h.b16 %v1431
        %v1468 = vunpack.c.l.b16 %v1432
        %v1469 = vunpack.c.h.b16 %v1432
        %v1470 = vunpack.c.l.b16 %v1433
        %v1471 = vunpack.c.h.b16 %v1433
        %v1472 = vunpack.c.l.b16 %v1434
        %v1473 = vunpack.c.h.b16 %v1434
        %v1474 = vunpack.c.l.b16 %v1435
        %v1475 = vunpack.c.h.b16 %v1435
        %v1476 = vunpack.c.l.b16 %v1436
        %v1477 = vunpack.c.h.b16 %v1436
        %v1478 = vunpack.c.l.b16 %v1437
        %v1479 = vunpack.c.h.b16 %v1437
        %v1480 = vunpack.c.l.b16 %v1438
        %v1481 = vunpack.c.h.b16 %v1438
        %v1482 = vunpack.c.l.b16 %v1439
        %v1483 = vunpack.c.h.b16 %v1439
        %v1484 = vunpack.c.l.b16 %v1440
        %v1485 = vunpack.c.h.b16 %v1440
        %v1486 = vunpack.c.l.b16 %v1441
        %v1487 = vunpack.c.h.b16 %v1441
        %v1488 = vunpack.c.l.b16 %v1442
        %v1489 = vunpack.c.h.b16 %v1442
        %v1490 = vunpack.c.l.b16 %v1443
        %v1491 = vunpack.c.h.b16 %v1443
        %v1492 = vunpack.c.l.b16 %v1444
        %v1493 = vunpack.c.h.b16 %v1444
        %v1494 = vpack.c.b16 %v1468, %v1466
        %v1495 = vpack.c.b16 %v1469, %v1467
        %v1496 = vpack.c.b16 %v1472, %v1470
        %v1497 = vpack.c.b16 %v1473, %v1471
        %v1498 = vpack.c.b16 %v1476, %v1474
        %v1499 = vpack.c.b16 %v1477, %v1475
        %v1500 = vpack.c.b16 %v1480, %v1478
        %v1501 = vpack.c.b16 %v1481, %v1479
        %v1502 = vpack.c.b16 %v1484, %v1482
        %v1503 = vpack.c.b16 %v1485, %v1483
        %v1504 = vpack.c.b16 %v1488, %v1486
        %v1505 = vpack.c.b16 %v1489, %v1487
        %v1506 = vpack.c.b16 %v1492, %v1490
        %v1507 = vpack.c.b16 %v1493, %v1491
        %vm1522 = vcmask 916480
        %v1524 = vsel %vm1522, %v1451, 0
        %1526 = vmatprep.subr.bf16.mxu0 %v1495
        %1527 = vmatpush1.bf16.msra.mxu0 %v1494
        %1528 = vmatprep.subr.bf16.mxu0 %v1497
        %1529 = vmatpush1.bf16.msra.mxu0 %v1496
        %1530 = vmatprep.subr.bf16.mxu0 %v1499
        %1531 = vmatpush1.bf16.msra.mxu0 %v1498
        %1532 = vmatprep.subr.bf16.mxu0 %v1501
        %1533 = vmatpush1.bf16.msra.mxu0 %v1500
        %1534 = vmatprep.subr.bf16.mxu0 %v1503
        %1535 = vmatpush1.bf16.msra.mxu0 %v1502
        %1536 = vmatprep.subr.bf16.mxu0 %v1505
        %1537 = vmatpush1.bf16.msra.mxu0 %v1504
        %1538 = vmatprep.subr.bf16.mxu0 %v1507
        %1539 = vmatpush1.bf16.msra.mxu0 %v1506
        %1540 = vmatprep.subr.bf16.mxu0 0
        %1541 = vmatpush1.bf16.msra.mxu0 0
        %1542 = vmatprep.subr.bf16.mxu0 0
        %1543 = vmatpush1.bf16.msra.mxu0 0
        %1544 = vmatprep.subr.bf16.mxu0 0
        %1545 = vmatpush1.bf16.msra.mxu0 0
        %1546 = vmatprep.subr.bf16.mxu0 0
        %1547 = vmatpush1.bf16.msra.mxu0 0
        %1548 = vmatprep.subr.bf16.mxu0 0
        %1549 = vmatpush1.bf16.msra.mxu0 0
        %1550 = vmatprep.subr.bf16.mxu0 0
        %1551 = vmatpush1.bf16.msra.mxu0 0
        %1552 = vmatprep.subr.bf16.mxu0 0
        %1553 = vmatpush1.bf16.msra.mxu0 0
        %1554 = vmatprep.subr.bf16.mxu0 0
        %1555 = vmatpush1.bf16.msra.mxu0 0
        %1556 = vmatprep.subr.bf16.mxu0 0
        %1557 = vmatpush1.bf16.msra.mxu0 0
        %1558 = vmatprep.mubr.bf16.mxu0 0
        %1559 = vmatmul.mubr.bf16.gmra.mrb[0].mxu0 %v1524
        %v1560 = vpop.f32.mrb[0].mxu0
        %v1561 = vadd.f32 0.0, %v1560
        %v1562 = vpop.f32.mrb[0].mxu0
        %v1563 = vadd.f32 0.0, %v1562
        %v1564 = vpop.f32.mrb[0].mxu0
        %v1565 = vadd.f32 0.0, %v1564
        %v1566 = vpop.f32.mrb[0].mxu0
        %v1567 = vadd.f32 0.0, %v1566
        %1568 = vdwg.mxu0
        %v1583 = vunpack.c.l.b16 %v1416
        %v1584 = vunpack.c.h.b16 %v1416
        %v1585 = vunpack.c.l.b16 %v1417
        %v1586 = vunpack.c.h.b16 %v1417
        %v1587 = vunpack.c.l.b16 %v1418
        %v1588 = vunpack.c.h.b16 %v1418
        %v1589 = vunpack.c.l.b16 %v1419
        %v1590 = vunpack.c.h.b16 %v1419
        %v1591 = vunpack.c.l.b16 %v1420
        %v1592 = vunpack.c.h.b16 %v1420
        %v1593 = vunpack.c.l.b16 %v1421
        %v1594 = vunpack.c.h.b16 %v1421
        %v1595 = vunpack.c.l.b16 %v1422
        %v1596 = vunpack.c.h.b16 %v1422
        %v1597 = vunpack.c.l.b16 %v1423
        %v1598 = vunpack.c.h.b16 %v1423
        %v1599 = vunpack.c.l.b16 %v1424
        %v1600 = vunpack.c.h.b16 %v1424
        %v1601 = vunpack.c.l.b16 %v1425
        %v1602 = vunpack.c.h.b16 %v1425
        %v1603 = vunpack.c.l.b16 %v1426
        %v1604 = vunpack.c.h.b16 %v1426
        %v1605 = vunpack.c.l.b16 %v1427
        %v1606 = vunpack.c.h.b16 %v1427
        %v1607 = vunpack.c.l.b16 %v1428
        %v1608 = vunpack.c.h.b16 %v1428
        %v1609 = vunpack.c.l.b16 %v1429
        %v1610 = vunpack.c.h.b16 %v1429
        %v1611 = vpack.c.b16 %v1585, %v1583
        %v1612 = vpack.c.b16 %v1586, %v1584
        %v1613 = vpack.c.b16 %v1589, %v1587
        %v1614 = vpack.c.b16 %v1590, %v1588
        %v1615 = vpack.c.b16 %v1593, %v1591
        %v1616 = vpack.c.b16 %v1594, %v1592
        %v1617 = vpack.c.b16 %v1597, %v1595
        %v1618 = vpack.c.b16 %v1598, %v1596
        %v1619 = vpack.c.b16 %v1601, %v1599
        %v1620 = vpack.c.b16 %v1602, %v1600
        %v1621 = vpack.c.b16 %v1605, %v1603
        %v1622 = vpack.c.b16 %v1606, %v1604
        %v1623 = vpack.c.b16 %v1609, %v1607
        %v1624 = vpack.c.b16 %v1610, %v1608
        %v1639 = vsel %vm1522, %v1415, 0
        %1641 = vmatprep.subr.bf16.mxu0 %v1612
        %1642 = vmatpush1.bf16.msra.mxu0 %v1611
        %1643 = vmatprep.subr.bf16.mxu0 %v1614
        %1644 = vmatpush1.bf16.msra.mxu0 %v1613
        %1645 = vmatprep.subr.bf16.mxu0 %v1616
        %1646 = vmatpush1.bf16.msra.mxu0 %v1615
        %1647 = vmatprep.subr.bf16.mxu0 %v1618
        %1648 = vmatpush1.bf16.msra.mxu0 %v1617
        %1649 = vmatprep.subr.bf16.mxu0 %v1620
        %1650 = vmatpush1.bf16.msra.mxu0 %v1619
        %1651 = vmatprep.subr.bf16.mxu0 %v1622
        %1652 = vmatpush1.bf16.msra.mxu0 %v1621
        %1653 = vmatprep.subr.bf16.mxu0 %v1624
        %1654 = vmatpush1.bf16.msra.mxu0 %v1623
        %1655 = vmatprep.subr.bf16.mxu0 0
        %1656 = vmatpush1.bf16.msra.mxu0 0
        %1657 = vmatprep.subr.bf16.mxu0 0
        %1658 = vmatpush1.bf16.msra.mxu0 0
        %1659 = vmatprep.subr.bf16.mxu0 0
        %1660 = vmatpush1.bf16.msra.mxu0 0
        %1661 = vmatprep.subr.bf16.mxu0 0
        %1662 = vmatpush1.bf16.msra.mxu0 0
        %1663 = vmatprep.subr.bf16.mxu0 0
        %1664 = vmatpush1.bf16.msra.mxu0 0
        %1665 = vmatprep.subr.bf16.mxu0 0
        %1666 = vmatpush1.bf16.msra.mxu0 0
        %1667 = vmatprep.subr.bf16.mxu0 0
        %1668 = vmatpush1.bf16.msra.mxu0 0
        %1669 = vmatprep.subr.bf16.mxu0 0
        %1670 = vmatpush1.bf16.msra.mxu0 0
        %1671 = vmatprep.subr.bf16.mxu0 0
        %1672 = vmatpush1.bf16.msra.mxu0 0
        %1673 = vmatprep.mubr.bf16.mxu0 0
        %1674 = vmatmul.mubr.bf16.gmra.mrb[0].mxu0 %v1639
        %v1675 = vpop.f32.mrb[0].mxu0
        %v1676 = vadd.f32 %v1561, %v1675
        %v1677 = vpop.f32.mrb[0].mxu0
        %v1678 = vadd.f32 %v1563, %v1677
        %v1679 = vpop.f32.mrb[0].mxu0
        %v1680 = vadd.f32 %v1565, %v1679
        %v1681 = vpop.f32.mrb[0].mxu0
        %v1682 = vadd.f32 %v1567, %v1681
        %1683 = vdwg.mxu0
        %s1684 = scalar_lea.vmem %s4, 224
        %v1685 = vld [vmem:[%s1684] sm:$0xff]
        %v1686 = vld [vmem:[%s1684 + $0x8] sm:$0xff]
        %v1687 = vld [vmem:[%s1684 + $0x10] sm:$0xff]
        %v1688 = vld [vmem:[%s1684 + $0x18] sm:$0xff]
        %v1689 = vld [vmem:[%s1684 + $0x20] sm:$0xff]
        %v1690 = vld [vmem:[%s1684 + $0x28] sm:$0xff]
        %v1691 = vld [vmem:[%s1684 + $0x30] sm:$0xff]
        %v1692 = vld [vmem:[%s1684 + $0x38] sm:$0xff]
        %v1693 = vld [vmem:[%s1684 + $0x40] sm:$0xff]
        %v1694 = vld [vmem:[%s1684 + $0x48] sm:$0xff]
        %v1695 = vld [vmem:[%s1684 + $0x50] sm:$0xff]
        %v1696 = vld [vmem:[%s1684 + $0x58] sm:$0xff]
        %v1697 = vld [vmem:[%s1684 + $0x60] sm:$0xff]
        %v1698 = vld [vmem:[%s1684 + $0x68] sm:$0xff]
        %v1700 = vrot.slane %v1415, 1
        %v1715 = vunpack.c.l.b16 %v1685
        %v1716 = vunpack.c.h.b16 %v1685
        %v1717 = vunpack.c.l.b16 %v1686
        %v1718 = vunpack.c.h.b16 %v1686
        %v1719 = vunpack.c.l.b16 %v1687
        %v1720 = vunpack.c.h.b16 %v1687
        %v1721 = vunpack.c.l.b16 %v1688
        %v1722 = vunpack.c.h.b16 %v1688
        %v1723 = vunpack.c.l.b16 %v1689
        %v1724 = vunpack.c.h.b16 %v1689
        %v1725 = vunpack.c.l.b16 %v1690
        %v1726 = vunpack.c.h.b16 %v1690
        %v1727 = vunpack.c.l.b16 %v1691
        %v1728 = vunpack.c.h.b16 %v1691
        %v1729 = vunpack.c.l.b16 %v1692
        %v1730 = vunpack.c.h.b16 %v1692
        %v1731 = vunpack.c.l.b16 %v1693
        %v1732 = vunpack.c.h.b16 %v1693
        %v1733 = vunpack.c.l.b16 %v1694
        %v1734 = vunpack.c.h.b16 %v1694
        %v1735 = vunpack.c.l.b16 %v1695
        %v1736 = vunpack.c.h.b16 %v1695
        %v1737 = vunpack.c.l.b16 %v1696
        %v1738 = vunpack.c.h.b16 %v1696
        %v1739 = vunpack.c.l.b16 %v1697
        %v1740 = vunpack.c.h.b16 %v1697
        %v1741 = vunpack.c.l.b16 %v1698
        %v1742 = vunpack.c.h.b16 %v1698
        %v1743 = vpack.c.b16 %v1717, %v1715
        %v1744 = vpack.c.b16 %v1718, %v1716
        %v1745 = vpack.c.b16 %v1721, %v1719
        %v1746 = vpack.c.b16 %v1722, %v1720
        %v1747 = vpack.c.b16 %v1725, %v1723
        %v1748 = vpack.c.b16 %v1726, %v1724
        %v1749 = vpack.c.b16 %v1729, %v1727
        %v1750 = vpack.c.b16 %v1730, %v1728
        %v1751 = vpack.c.b16 %v1733, %v1731
        %v1752 = vpack.c.b16 %v1734, %v1732
        %v1753 = vpack.c.b16 %v1737, %v1735
        %v1754 = vpack.c.b16 %v1738, %v1736
        %v1755 = vpack.c.b16 %v1741, %v1739
        %v1756 = vpack.c.b16 %v1742, %v1740
        %v1772 = vsel %vm1522, %v1700, 0
        %1774 = vmatprep.subr.bf16.mxu0 %v1744
        %1775 = vmatpush1.bf16.msra.mxu0 %v1743
        %1776 = vmatprep.subr.bf16.mxu0 %v1746
        %1777 = vmatpush1.bf16.msra.mxu0 %v1745
        %1778 = vmatprep.subr.bf16.mxu0 %v1748
        %1779 = vmatpush1.bf16.msra.mxu0 %v1747
        %1780 = vmatprep.subr.bf16.mxu0 %v1750
        %1781 = vmatpush1.bf16.msra.mxu0 %v1749
        %1782 = vmatprep.subr.bf16.mxu0 %v1752
        %1783 = vmatpush1.bf16.msra.mxu0 %v1751
        %1784 = vmatprep.subr.bf16.mxu0 %v1754
        %1785 = vmatpush1.bf16.msra.mxu0 %v1753
        %1786 = vmatprep.subr.bf16.mxu0 %v1756
        %1787 = vmatpush1.bf16.msra.mxu0 %v1755
        %1788 = vmatprep.subr.bf16.mxu0 0
        %1789 = vmatpush1.bf16.msra.mxu0 0
        %1790 = vmatprep.subr.bf16.mxu0 0
        %1791 = vmatpush1.bf16.msra.mxu0 0
        %1792 = vmatprep.subr.bf16.mxu0 0
        %1793 = vmatpush1.bf16.msra.mxu0 0
        %1794 = vmatprep.subr.bf16.mxu0 0
        %1795 = vmatpush1.bf16.msra.mxu0 0
        %1796 = vmatprep.subr.bf16.mxu0 0
        %1797 = vmatpush1.bf16.msra.mxu0 0
        %1798 = vmatprep.subr.bf16.mxu0 0
        %1799 = vmatpush1.bf16.msra.mxu0 0
        %1800 = vmatprep.subr.bf16.mxu0 0
        %1801 = vmatpush1.bf16.msra.mxu0 0
        %1802 = vmatprep.subr.bf16.mxu0 0
        %1803 = vmatpush1.bf16.msra.mxu0 0
        %1804 = vmatprep.subr.bf16.mxu0 0
        %1805 = vmatpush1.bf16.msra.mxu0 0
        %1806 = vmatprep.mubr.bf16.mxu0 0
        %1807 = vmatmul.mubr.bf16.gmra.mrb[0].mxu0 %v1772
        %v1808 = vpop.f32.mrb[0].mxu0
        %v1809 = vadd.f32 0.0, %v1808
        %v1810 = vpop.f32.mrb[0].mxu0
        %v1811 = vadd.f32 0.0, %v1810
        %v1812 = vpop.f32.mrb[0].mxu0
        %v1813 = vadd.f32 0.0, %v1812
        %v1814 = vpop.f32.mrb[0].mxu0
        %v1815 = vadd.f32 0.0, %v1814
        %1816 = vdwg.mxu0
        %v1817 = vadd.f32 %v1676, %v1809
        %v1818 = vadd.f32 %v1678, %v1811
        %v1819 = vadd.f32 %v1680, %v1813
        %v1820 = vadd.f32 %v1682, %v1815
        %s1821 = scalar_lea.vmem %s4, 336
        %v1822 = vld [vmem:[%s1821] sm:$0xff]
        %v1823 = vld [vmem:[%s1821 + $0x8] sm:$0xff]
        %v1824 = vld [vmem:[%s1821 + $0x10] sm:$0xff]
        %v1825 = vld [vmem:[%s1821 + $0x18] sm:$0xff]
        %v1826 = vld [vmem:[%s1821 + $0x20] sm:$0xff]
        %v1827 = vld [vmem:[%s1821 + $0x28] sm:$0xff]
        %v1828 = vld [vmem:[%s1821 + $0x30] sm:$0xff]
        %v1829 = vld [vmem:[%s1821 + $0x38] sm:$0xff]
        %v1830 = vld [vmem:[%s1821 + $0x40] sm:$0xff]
        %v1831 = vld [vmem:[%s1821 + $0x48] sm:$0xff]
        %v1832 = vld [vmem:[%s1821 + $0x50] sm:$0xff]
        %v1833 = vld [vmem:[%s1821 + $0x58] sm:$0xff]
        %v1834 = vld [vmem:[%s1821 + $0x60] sm:$0xff]
        %v1835 = vld [vmem:[%s1821 + $0x68] sm:$0xff]
        %v1836 = vrot.slane %v1446, 1
        %v1837 = vrot.slane %v1448, 2
        %v1838 = vor.u32 %v1836, %v1837
        %v1853 = vunpack.c.l.b16 %v1822
        %v1854 = vunpack.c.h.b16 %v1822
        %v1855 = vunpack.c.l.b16 %v1823
        %v1856 = vunpack.c.h.b16 %v1823
        %v1857 = vunpack.c.l.b16 %v1824
        %v1858 = vunpack.c.h.b16 %v1824
        %v1859 = vunpack.c.l.b16 %v1825
        %v1860 = vunpack.c.h.b16 %v1825
        %v1861 = vunpack.c.l.b16 %v1826
        %v1862 = vunpack.c.h.b16 %v1826
        %v1863 = vunpack.c.l.b16 %v1827
        %v1864 = vunpack.c.h.b16 %v1827
        %v1865 = vunpack.c.l.b16 %v1828
        %v1866 = vunpack.c.h.b16 %v1828
        %v1867 = vunpack.c.l.b16 %v1829
        %v1868 = vunpack.c.h.b16 %v1829
        %v1869 = vunpack.c.l.b16 %v1830
        %v1870 = vunpack.c.h.b16 %v1830
        %v1871 = vunpack.c.l.b16 %v1831
        %v1872 = vunpack.c.h.b16 %v1831
        %v1873 = vunpack.c.l.b16 %v1832
        %v1874 = vunpack.c.h.b16 %v1832
        %v1875 = vunpack.c.l.b16 %v1833
        %v1876 = vunpack.c.h.b16 %v1833
        %v1877 = vunpack.c.l.b16 %v1834
        %v1878 = vunpack.c.h.b16 %v1834
        %v1879 = vunpack.c.l.b16 %v1835
        %v1880 = vunpack.c.h.b16 %v1835
        %v1881 = vpack.c.b16 %v1855, %v1853
        %v1882 = vpack.c.b16 %v1856, %v1854
        %v1883 = vpack.c.b16 %v1859, %v1857
        %v1884 = vpack.c.b16 %v1860, %v1858
        %v1885 = vpack.c.b16 %v1863, %v1861
        %v1886 = vpack.c.b16 %v1864, %v1862
        %v1887 = vpack.c.b16 %v1867, %v1865
        %v1888 = vpack.c.b16 %v1868, %v1866
        %v1889 = vpack.c.b16 %v1871, %v1869
        %v1890 = vpack.c.b16 %v1872, %v1870
        %v1891 = vpack.c.b16 %v1875, %v1873
        %v1892 = vpack.c.b16 %v1876, %v1874
        %v1893 = vpack.c.b16 %v1879, %v1877
        %v1894 = vpack.c.b16 %v1880, %v1878
        %v1910 = vsel %vm1522, %v1838, 0
        %1912 = vmatprep.subr.bf16.mxu0 %v1882
        %1913 = vmatpush1.bf16.msra.mxu0 %v1881
        %1914 = vmatprep.subr.bf16.mxu0 %v1884
        %1915 = vmatpush1.bf16.msra.mxu0 %v1883
        %1916 = vmatprep.subr.bf16.mxu0 %v1886
        %1917 = vmatpush1.bf16.msra.mxu0 %v1885
        %1918 = vmatprep.subr.bf16.mxu0 %v1888
        %1919 = vmatpush1.bf16.msra.mxu0 %v1887
        %1920 = vmatprep.subr.bf16.mxu0 %v1890
        %1921 = vmatpush1.bf16.msra.mxu0 %v1889
        %1922 = vmatprep.subr.bf16.mxu0 %v1892
        %1923 = vmatpush1.bf16.msra.mxu0 %v1891
        %1924 = vmatprep.subr.bf16.mxu0 %v1894
        %1925 = vmatpush1.bf16.msra.mxu0 %v1893
        %1926 = vmatprep.subr.bf16.mxu0 0
        %1927 = vmatpush1.bf16.msra.mxu0 0
        %1928 = vmatprep.subr.bf16.mxu0 0
        %1929 = vmatpush1.bf16.msra.mxu0 0
        %1930 = vmatprep.subr.bf16.mxu0 0
        %1931 = vmatpush1.bf16.msra.mxu0 0
        %1932 = vmatprep.subr.bf16.mxu0 0
        %1933 = vmatpush1.bf16.msra.mxu0 0
        %1934 = vmatprep.subr.bf16.mxu0 0
        %1935 = vmatpush1.bf16.msra.mxu0 0
        %1936 = vmatprep.subr.bf16.mxu0 0
        %1937 = vmatpush1.bf16.msra.mxu0 0
        %1938 = vmatprep.subr.bf16.mxu0 0
        %1939 = vmatpush1.bf16.msra.mxu0 0
        %1940 = vmatprep.subr.bf16.mxu0 0
        %1941 = vmatpush1.bf16.msra.mxu0 0
        %1942 = vmatprep.subr.bf16.mxu0 0
        %1943 = vmatpush1.bf16.msra.mxu0 0
        %1944 = vmatprep.mubr.bf16.mxu0 0
        %1945 = vmatmul.mubr.bf16.gmra.mrb[0].mxu0 %v1910
        %v1946 = vpop.f32.mrb[0].mxu0
        %v1947 = vadd.f32 0.0, %v1946
        %v1948 = vpop.f32.mrb[0].mxu0
        %v1949 = vadd.f32 0.0, %v1948
        %v1950 = vpop.f32.mrb[0].mxu0
        %v1951 = vadd.f32 0.0, %v1950
        %v1952 = vpop.f32.mrb[0].mxu0
        %v1953 = vadd.f32 0.0, %v1952
        %1954 = vdwg.mxu0
        %v1955 = vadd.f32 %v1817, %v1947
        %v1956 = vadd.f32 %v1818, %v1949
        %v1957 = vadd.f32 %v1819, %v1951
        %v1958 = vadd.f32 %v1820, %v1953
        %s1959 = scalar_lea.vmem %s4, 448
        %v1960 = vld [vmem:[%s1959] sm:$0xff]
        %v1961 = vld [vmem:[%s1959 + $0x8] sm:$0xff]
        %v1962 = vld [vmem:[%s1959 + $0x10] sm:$0xff]
        %v1963 = vld [vmem:[%s1959 + $0x18] sm:$0xff]
        %v1964 = vld [vmem:[%s1959 + $0x20] sm:$0xff]
        %v1965 = vld [vmem:[%s1959 + $0x28] sm:$0xff]
        %v1966 = vld [vmem:[%s1959 + $0x30] sm:$0xff]
        %v1967 = vld [vmem:[%s1959 + $0x38] sm:$0xff]
        %v1968 = vld [vmem:[%s1959 + $0x40] sm:$0xff]
        %v1969 = vld [vmem:[%s1959 + $0x48] sm:$0xff]
        %v1970 = vld [vmem:[%s1959 + $0x50] sm:$0xff]
        %v1971 = vld [vmem:[%s1959 + $0x58] sm:$0xff]
        %v1972 = vld [vmem:[%s1959 + $0x60] sm:$0xff]
        %v1973 = vld [vmem:[%s1959 + $0x68] sm:$0xff]
        %v1974 = vrot.slane %v1415, 2
        %v1989 = vunpack.c.l.b16 %v1960
        %v1990 = vunpack.c.h.b16 %v1960
        %v1991 = vunpack.c.l.b16 %v1961
        %v1992 = vunpack.c.h.b16 %v1961
        %v1993 = vunpack.c.l.b16 %v1962
        %v1994 = vunpack.c.h.b16 %v1962
        %v1995 = vunpack.c.l.b16 %v1963
        %v1996 = vunpack.c.h.b16 %v1963
        %v1997 = vunpack.c.l.b16 %v1964
        %v1998 = vunpack.c.h.b16 %v1964
        %v1999 = vunpack.c.l.b16 %v1965
        %v2000 = vunpack.c.h.b16 %v1965
        %v2001 = vunpack.c.l.b16 %v1966
        %v2002 = vunpack.c.h.b16 %v1966
        %v2003 = vunpack.c.l.b16 %v1967
        %v2004 = vunpack.c.h.b16 %v1967
        %v2005 = vunpack.c.l.b16 %v1968
        %v2006 = vunpack.c.h.b16 %v1968
        %v2007 = vunpack.c.l.b16 %v1969
        %v2008 = vunpack.c.h.b16 %v1969
        %v2009 = vunpack.c.l.b16 %v1970
        %v2010 = vunpack.c.h.b16 %v1970
        %v2011 = vunpack.c.l.b16 %v1971
        %v2012 = vunpack.c.h.b16 %v1971
        %v2013 = vunpack.c.l.b16 %v1972
        %v2014 = vunpack.c.h.b16 %v1972
        %v2015 = vunpack.c.l.b16 %v1973
        %v2016 = vunpack.c.h.b16 %v1973
        %v2017 = vpack.c.b16 %v1991, %v1989
        %v2018 = vpack.c.b16 %v1992, %v1990
        %v2019 = vpack.c.b16 %v1995, %v1993
        %v2020 = vpack.c.b16 %v1996, %v1994
        %v2021 = vpack.c.b16 %v1999, %v1997
        %v2022 = vpack.c.b16 %v2000, %v1998
        %v2023 = vpack.c.b16 %v2003, %v2001
        %v2024 = vpack.c.b16 %v2004, %v2002
        %v2025 = vpack.c.b16 %v2007, %v2005
        %v2026 = vpack.c.b16 %v2008, %v2006
        %v2027 = vpack.c.b16 %v2011, %v2009
        %v2028 = vpack.c.b16 %v2012, %v2010
        %v2029 = vpack.c.b16 %v2015, %v2013
        %v2030 = vpack.c.b16 %v2016, %v2014
        %v2046 = vsel %vm1522, %v1974, 0
        %2048 = vmatprep.subr.bf16.mxu0 %v2018
        %2049 = vmatpush1.bf16.msra.mxu0 %v2017
        %2050 = vmatprep.subr.bf16.mxu0 %v2020
        %2051 = vmatpush1.bf16.msra.mxu0 %v2019
        %2052 = vmatprep.subr.bf16.mxu0 %v2022
        %2053 = vmatpush1.bf16.msra.mxu0 %v2021
        %2054 = vmatprep.subr.bf16.mxu0 %v2024
        %2055 = vmatpush1.bf16.msra.mxu0 %v2023
        %2056 = vmatprep.subr.bf16.mxu0 %v2026
        %2057 = vmatpush1.bf16.msra.mxu0 %v2025
        %2058 = vmatprep.subr.bf16.mxu0 %v2028
        %2059 = vmatpush1.bf16.msra.mxu0 %v2027
        %2060 = vmatprep.subr.bf16.mxu0 %v2030
        %2061 = vmatpush1.bf16.msra.mxu0 %v2029
        %2062 = vmatprep.subr.bf16.mxu0 0
        %2063 = vmatpush1.bf16.msra.mxu0 0
        %2064 = vmatprep.subr.bf16.mxu0 0
        %2065 = vmatpush1.bf16.msra.mxu0 0
        %2066 = vmatprep.subr.bf16.mxu0 0
        %2067 = vmatpush1.bf16.msra.mxu0 0
        %2068 = vmatprep.subr.bf16.mxu0 0
        %2069 = vmatpush1.bf16.msra.mxu0 0
        %2070 = vmatprep.subr.bf16.mxu0 0
        %2071 = vmatpush1.bf16.msra.mxu0 0
        %2072 = vmatprep.subr.bf16.mxu0 0
        %2073 = vmatpush1.bf16.msra.mxu0 0
        %2074 = vmatprep.subr.bf16.mxu0 0
        %2075 = vmatpush1.bf16.msra.mxu0 0
        %2076 = vmatprep.subr.bf16.mxu0 0
        %2077 = vmatpush1.bf16.msra.mxu0 0
        %2078 = vmatprep.subr.bf16.mxu0 0
        %2079 = vmatpush1.bf16.msra.mxu0 0
        %2080 = vmatprep.mubr.bf16.mxu0 0
        %2081 = vmatmul.mubr.bf16.gmra.mrb[0].mxu0 %v2046
        %v2082 = vpop.f32.mrb[0].mxu0
        %v2083 = vadd.f32 0.0, %v2082
        %v2084 = vpop.f32.mrb[0].mxu0
        %v2085 = vadd.f32 0.0, %v2084
        %v2086 = vpop.f32.mrb[0].mxu0
        %v2087 = vadd.f32 0.0, %v2086
        %v2088 = vpop.f32.mrb[0].mxu0
        %v2089 = vadd.f32 0.0, %v2088
        %2090 = vdwg.mxu0
        %v2091 = vadd.f32 %v1955, %v2083
        %v2092 = vadd.f32 %v1956, %v2085
        %v2093 = vadd.f32 %v1957, %v2087
        %v2094 = vadd.f32 %v1958, %v2089
        %2099 = vrot.lane.b32.xlu0 %v2091, 48
        %v2100 = vpop.permute.xlu0 %2099
        %2101 = vrot.lane.b32.xlu0 %v2092, 48
        %v2102 = vpop.permute.xlu0 %2101
        %2103 = vrot.lane.b32.xlu0 %v2093, 48
        %v2104 = vpop.permute.xlu0 %2103
        %2105 = vrot.lane.b32.xlu0 %v2094, 48
        %v2106 = vpop.permute.xlu0 %2105
        %vm2107 = vcmask 392192
        %v2108 = vsel %vm2107, %v2100, %v2102
        %v2109 = vsel %vm2107, %v2104, %v2106
        %v2112 = vmax.f32 %v2091, %v2108
        %v2113 = vmax.f32 %v2093, %v2109
        %v2114 = vld [vmem:[%s5] sm:$0xff]
        %v2115 = vld [vmem:[%s5 + $0x8] sm:$0x3]
        %vm2116 = vcmask 80896
        %v2118 = vsel %vm2116, %v2114, 0
        %v2121 = vsel %vm2116, %v2115, 0
        %v2124 = vsel %vm1394, %v2113, 0
        %2126 = vmatprep.subr.mxu0 0.0
        %2127 = vmatpush1.msra.mxu0 %v2112
        %2128 = vmatprep.subr.mxu0 0.0
        %2129 = vmatpush1.msra.mxu0 %v2124
        %2130 = vmatprep.subr.mxu0 0.0
        %2131 = vmatpush1.msra.mxu0 0.0
        %2132 = vmatprep.subr.mxu0 0.0
        %2133 = vmatpush1.msra.mxu0 0.0
        %2134 = vmatprep.subr.mxu0 0.0
        %2135 = vmatpush1.msra.mxu0 0.0
        %2136 = vmatprep.subr.mxu0 0.0
        %2137 = vmatpush1.msra.mxu0 0.0
        %2138 = vmatprep.subr.mxu0 0.0
        %2139 = vmatpush1.msra.mxu0 0.0
        %2140 = vmatprep.subr.mxu0 0.0
        %2141 = vmatpush1.msra.mxu0 0.0
        %2142 = vmatprep.subr.mxu0 0.0
        %2143 = vmatpush1.msra.mxu0 0.0
        %2144 = vmatprep.subr.mxu0 0.0
        %2145 = vmatpush1.msra.mxu0 0.0
        %2146 = vmatprep.subr.mxu0 0.0
        %2147 = vmatpush1.msra.mxu0 0.0
        %2148 = vmatprep.subr.mxu0 0.0
        %2149 = vmatpush1.msra.mxu0 0.0
        %2150 = vmatprep.subr.mxu0 0.0
        %2151 = vmatpush1.msra.mxu0 0.0
        %2152 = vmatprep.subr.mxu0 0.0
        %2153 = vmatpush1.msra.mxu0 0.0
        %2154 = vmatprep.subr.mxu0 0.0
        %2155 = vmatpush1.msra.mxu0 0.0
        %2156 = vmatprep.subr.mxu0 0.0
        %2157 = vmatpush1.msra.mxu0 0.0
        %2158 = vmatprep.subr.mxu0 0.0
        %2159 = vmatpush1.msra.mxu0 0.0
        %2160 = vmatprep.subr.mxu0 0.0
        %2161 = vmatpush1.msra.mxu0 0.0
        %2162 = vmatprep.subr.mxu0 0.0
        %2163 = vmatpush1.msra.mxu0 0.0
        %2164 = vmatprep.subr.mxu0 0.0
        %2165 = vmatpush1.msra.mxu0 0.0
        %2166 = vmatprep.subr.mxu0 0.0
        %2167 = vmatpush1.msra.mxu0 0.0
        %2168 = vmatprep.subr.mxu0 0.0
        %2169 = vmatpush1.msra.mxu0 0.0
        %2170 = vmatprep.subr.mxu0 0.0
        %2171 = vmatpush1.msra.mxu0 0.0
        %2172 = vmatprep.subr.mxu0 0.0
        %2173 = vmatpush1.msra.mxu0 0.0
        %2174 = vmatprep.subr.mxu0 0.0
        %2175 = vmatpush1.msra.mxu0 0.0
        %2176 = vmatprep.subr.mxu0 0.0
        %2177 = vmatpush1.msra.mxu0 0.0
        %2178 = vmatprep.subr.mxu0 0.0
        %2179 = vmatpush1.msra.mxu0 0.0
        %2180 = vmatprep.subr.mxu0 0.0
        %2181 = vmatpush1.msra.mxu0 0.0
        %2182 = vmatprep.subr.mxu0 0.0
        %2183 = vmatpush1.msra.mxu0 0.0
        %2184 = vmatprep.subr.mxu0 0.0
        %2185 = vmatpush1.msra.mxu0 0.0
        %2186 = vmatprep.subr.mxu0 0.0
        %2187 = vmatpush1.msra.mxu0 0.0
        %2188 = vmatprep.subr.mxu0 0.0
        %2189 = vmatpush1.msra.mxu0 0.0
        %2190 = vmatprep.mubr.f32.mxu0 0.0
        %2191 = vmatmul.mubr.f32.gmra.mrb[0].mxu0 %v2118
        %v2192 = vpop.f32.mrb[0].mxu0
        %v2193 = vadd.f32 0.0, %v2192
        %v2194 = vpop.f32.mrb[0].mxu0
        %2195 = vmatprep.mubr.f32.mxu0 0.0
        %2196 = vmatmul.mubr.f32.gmra.mrb[0].mxu0 %v2121
        %v2197 = vpop.f32.mrb[0].mxu0
        %v2198 = vadd.f32 0.0, %v2197
        %v2199 = vpop.f32.mrb[0].mxu0
        %2200 = vdwg.mxu0
        %vm2203 = vcmask 1042432
        %v2204 = vrot.slane %v2193, 5
        %v2205 = vrot.slane %v2198, 5
        %v2206 = vsel %vm2203, %v2204, %v2205
        %v2208 = vmax.f32 %v2193, %v2206
        %v2209 = vld [vmem:[%s6] sm:$0x1]
        %v2211 = vlaneseq
        %v2212 = vshrl.u32 %v2211, 7
        %v2213 = vsub.s32 0, %v2212
        %v2214 = vrot.slane %v2209, %v2213
        %v2216 = vadd.f32 %v2208, %v2214
        %v2217 = vmax.f32 %v2216, 0.0
        %v2218 = vpack.c.bf16 %v2217, %v2217
        %v2219 = vld [vmem:[%s7] sm:$0xf]
        %v2220 = vld [vmem:[%s7 + $0x4] sm:$0xf]
        %v2221 = vld [vmem:[%s7 + $0x8] sm:$0xf]
        %v2222 = vld [vmem:[%s7 + $0xc] sm:$0xf]
        %v2223 = vld [vmem:[%s7 + $0x10] sm:$0xf]
        %v2224 = vld [vmem:[%s7 + $0x14] sm:$0xf]
        %v2225 = vld [vmem:[%s7 + $0x18] sm:$0xf]
        %v2226 = vld [vmem:[%s7 + $0x1c] sm:$0xf]
        %v2227 = vld [vmem:[%s7 + $0x20] sm:$0xf]
        %v2228 = vld [vmem:[%s7 + $0x24] sm:$0xf]
        %s2229 = scalar_lea.vmem %s7, 40
        %v2230 = vld [vmem:[%s2229] sm:$0xf]
        %v2231 = vld [vmem:[%s2229 + $0x4] sm:$0xf]
        %v2232 = vld [vmem:[%s2229 + $0x8] sm:$0xf]
        %v2233 = vld [vmem:[%s2229 + $0xc] sm:$0xf]
        %v2234 = vld [vmem:[%s2229 + $0x10] sm:$0xf]
        %v2235 = vld [vmem:[%s2229 + $0x14] sm:$0xf]
        %v2236 = vld [vmem:[%s2229 + $0x18] sm:$0xf]
        %v2237 = vld [vmem:[%s2229 + $0x1c] sm:$0xf]
        %v2238 = vld [vmem:[%s2229 + $0x20] sm:$0xf]
        %v2239 = vld [vmem:[%s2229 + $0x24] sm:$0xf]
        %v2241 = vshrl.u32 %v2218, 16
        %v2243 = vshll.u32 %v2218, 16
        %v2245 = vrot.slane %v2243, 1
        %v2246 = vor.u32 %v2241, %v2245
        %v2257 = vunpack.c.l.b16 %v2230
        %v2258 = vunpack.c.l.b16 %v2231
        %v2259 = vunpack.c.l.b16 %v2232
        %v2260 = vunpack.c.l.b16 %v2233
        %v2261 = vunpack.c.l.b16 %v2234
        %v2262 = vunpack.c.l.b16 %v2235
        %v2263 = vunpack.c.l.b16 %v2236
        %v2264 = vunpack.c.l.b16 %v2237
        %v2265 = vunpack.c.l.b16 %v2238
        %v2266 = vunpack.c.l.b16 %v2239
        %v2267 = vpack.c.b16 %v2258, %v2257
        %v2268 = vpack.c.b16 %v2260, %v2259
        %v2269 = vpack.c.b16 %v2262, %v2261
        %v2270 = vpack.c.b16 %v2264, %v2263
        %v2271 = vpack.c.b16 %v2266, %v2265
        %vm2277 = vcmask 654336
        %v2279 = vsel %vm2277, %v2246, 0
        %2281 = vmatprep.subr.bf16.mxu0 0
        %2282 = vmatpush1.bf16.msra.mxu0 %v2267
        %2283 = vmatprep.subr.bf16.mxu0 0
        %2284 = vmatpush1.bf16.msra.mxu0 %v2268
        %2285 = vmatprep.subr.bf16.mxu0 0
        %2286 = vmatpush1.bf16.msra.mxu0 %v2269
        %2287 = vmatprep.subr.bf16.mxu0 0
        %2288 = vmatpush1.bf16.msra.mxu0 %v2270
        %2289 = vmatprep.subr.bf16.mxu0 0
        %2290 = vmatpush1.bf16.msra.mxu0 %v2271
        %2291 = vmatprep.subr.bf16.mxu0 0
        %2292 = vmatpush1.bf16.msra.mxu0 0
        %2293 = vmatprep.subr.bf16.mxu0 0
        %2294 = vmatpush1.bf16.msra.mxu0 0
        %2295 = vmatprep.subr.bf16.mxu0 0
        %2296 = vmatpush1.bf16.msra.mxu0 0
        %2297 = vmatprep.subr.bf16.mxu0 0
        %2298 = vmatpush1.bf16.msra.mxu0 0
        %2299 = vmatprep.subr.bf16.mxu0 0
        %2300 = vmatpush1.bf16.msra.mxu0 0
        %2301 = vmatprep.subr.bf16.mxu0 0
        %2302 = vmatpush1.bf16.msra.mxu0 0
        %2303 = vmatprep.subr.bf16.mxu0 0
        %2304 = vmatpush1.bf16.msra.mxu0 0
        %2305 = vmatprep.subr.bf16.mxu0 0
        %2306 = vmatpush1.bf16.msra.mxu0 0
        %2307 = vmatprep.subr.bf16.mxu0 0
        %2308 = vmatpush1.bf16.msra.mxu0 0
        %2309 = vmatprep.subr.bf16.mxu0 0
        %2310 = vmatpush1.bf16.msra.mxu0 0
        %2311 = vmatprep.subr.bf16.mxu0 0
        %2312 = vmatpush1.bf16.msra.mxu0 0
        %2313 = vmatprep.mubr.bf16.mxu0 0
        %2314 = vmatmul.mubr.bf16.gmra.mrb[0].mxu0 %v2279
        %v2315 = vpop.f32.mrb[0].mxu0
        %v2316 = vadd.f32 0.0, %v2315
        %v2317 = vpop.f32.mrb[0].mxu0
        %v2318 = vpop.f32.mrb[0].mxu0
        %v2319 = vpop.f32.mrb[0].mxu0
        %2320 = vdwg.mxu0
        %v2331 = vunpack.c.l.b16 %v2219
        %v2332 = vunpack.c.l.b16 %v2220
        %v2333 = vunpack.c.l.b16 %v2221
        %v2334 = vunpack.c.l.b16 %v2222
        %v2335 = vunpack.c.l.b16 %v2223
        %v2336 = vunpack.c.l.b16 %v2224
        %v2337 = vunpack.c.l.b16 %v2225
        %v2338 = vunpack.c.l.b16 %v2226
        %v2339 = vunpack.c.l.b16 %v2227
        %v2340 = vunpack.c.l.b16 %v2228
        %v2341 = vpack.c.b16 %v2332, %v2331
        %v2342 = vpack.c.b16 %v2334, %v2333
        %v2343 = vpack.c.b16 %v2336, %v2335
        %v2344 = vpack.c.b16 %v2338, %v2337
        %v2345 = vpack.c.b16 %v2340, %v2339
        %v2351 = vsel %vm2277, %v2218, 0
        %2353 = vmatprep.subr.bf16.mxu0 0
        %2354 = vmatpush1.bf16.msra.mxu0 %v2341
        %2355 = vmatprep.subr.bf16.mxu0 0
        %2356 = vmatpush1.bf16.msra.mxu0 %v2342
        %2357 = vmatprep.subr.bf16.mxu0 0
        %2358 = vmatpush1.bf16.msra.mxu0 %v2343
        %2359 = vmatprep.subr.bf16.mxu0 0
        %2360 = vmatpush1.bf16.msra.mxu0 %v2344
        %2361 = vmatprep.subr.bf16.mxu0 0
        %2362 = vmatpush1.bf16.msra.mxu0 %v2345
        %2363 = vmatprep.subr.bf16.mxu0 0
        %2364 = vmatpush1.bf16.msra.mxu0 0
        %2365 = vmatprep.subr.bf16.mxu0 0
        %2366 = vmatpush1.bf16.msra.mxu0 0
        %2367 = vmatprep.subr.bf16.mxu0 0
        %2368 = vmatpush1.bf16.msra.mxu0 0
        %2369 = vmatprep.subr.bf16.mxu0 0
        %2370 = vmatpush1.bf16.msra.mxu0 0
        %2371 = vmatprep.subr.bf16.mxu0 0
        %2372 = vmatpush1.bf16.msra.mxu0 0
        %2373 = vmatprep.subr.bf16.mxu0 0
        %2374 = vmatpush1.bf16.msra.mxu0 0
        %2375 = vmatprep.subr.bf16.mxu0 0
        %2376 = vmatpush1.bf16.msra.mxu0 0
        %2377 = vmatprep.subr.bf16.mxu0 0
        %2378 = vmatpush1.bf16.msra.mxu0 0
        %2379 = vmatprep.subr.bf16.mxu0 0
        %2380 = vmatpush1.bf16.msra.mxu0 0
        %2381 = vmatprep.subr.bf16.mxu0 0
        %2382 = vmatpush1.bf16.msra.mxu0 0
        %2383 = vmatprep.subr.bf16.mxu0 0
        %2384 = vmatpush1.bf16.msra.mxu0 0
        %2385 = vmatprep.mubr.bf16.mxu0 0
        %2386 = vmatmul.mubr.bf16.gmra.mrb[0].mxu0 %v2351
        %v2387 = vpop.f32.mrb[0].mxu0
        %v2388 = vadd.f32 %v2316, %v2387
        %v2389 = vpop.f32.mrb[0].mxu0
        %v2390 = vpop.f32.mrb[0].mxu0
        %v2391 = vpop.f32.mrb[0].mxu0
        %2392 = vdwg.mxu0
        %s2393 = scalar_lea.vmem %s7, 80
        %v2394 = vld [vmem:[%s2393] sm:$0xf]
        %v2395 = vld [vmem:[%s2393 + $0x4] sm:$0xf]
        %v2396 = vld [vmem:[%s2393 + $0x8] sm:$0xf]
        %v2397 = vld [vmem:[%s2393 + $0xc] sm:$0xf]
        %v2398 = vld [vmem:[%s2393 + $0x10] sm:$0xf]
        %v2399 = vld [vmem:[%s2393 + $0x14] sm:$0xf]
        %v2400 = vld [vmem:[%s2393 + $0x18] sm:$0xf]
        %v2401 = vld [vmem:[%s2393 + $0x1c] sm:$0xf]
        %v2402 = vld [vmem:[%s2393 + $0x20] sm:$0xf]
        %v2403 = vld [vmem:[%s2393 + $0x24] sm:$0xf]
        %v2405 = vrot.slane %v2218, 1
        %v2416 = vunpack.c.l.b16 %v2394
        %v2417 = vunpack.c.l.b16 %v2395
        %v2418 = vunpack.c.l.b16 %v2396
        %v2419 = vunpack.c.l.b16 %v2397
        %v2420 = vunpack.c.l.b16 %v2398
        %v2421 = vunpack.c.l.b16 %v2399
        %v2422 = vunpack.c.l.b16 %v2400
        %v2423 = vunpack.c.l.b16 %v2401
        %v2424 = vunpack.c.l.b16 %v2402
        %v2425 = vunpack.c.l.b16 %v2403
        %v2426 = vpack.c.b16 %v2417, %v2416
        %v2427 = vpack.c.b16 %v2419, %v2418
        %v2428 = vpack.c.b16 %v2421, %v2420
        %v2429 = vpack.c.b16 %v2423, %v2422
        %v2430 = vpack.c.b16 %v2425, %v2424
        %v2437 = vsel %vm2277, %v2405, 0
        %2439 = vmatprep.subr.bf16.mxu0 0
        %2440 = vmatpush1.bf16.msra.mxu0 %v2426
        %2441 = vmatprep.subr.bf16.mxu0 0
        %2442 = vmatpush1.bf16.msra.mxu0 %v2427
        %2443 = vmatprep.subr.bf16.mxu0 0
        %2444 = vmatpush1.bf16.msra.mxu0 %v2428
        %2445 = vmatprep.subr.bf16.mxu0 0
        %2446 = vmatpush1.bf16.msra.mxu0 %v2429
        %2447 = vmatprep.subr.bf16.mxu0 0
        %2448 = vmatpush1.bf16.msra.mxu0 %v2430
        %2449 = vmatprep.subr.bf16.mxu0 0
        %2450 = vmatpush1.bf16.msra.mxu0 0
        %2451 = vmatprep.subr.bf16.mxu0 0
        %2452 = vmatpush1.bf16.msra.mxu0 0
        %2453 = vmatprep.subr.bf16.mxu0 0
        %2454 = vmatpush1.bf16.msra.mxu0 0
        %2455 = vmatprep.subr.bf16.mxu0 0
        %2456 = vmatpush1.bf16.msra.mxu0 0
        %2457 = vmatprep.subr.bf16.mxu0 0
        %2458 = vmatpush1.bf16.msra.mxu0 0
        %2459 = vmatprep.subr.bf16.mxu0 0
        %2460 = vmatpush1.bf16.msra.mxu0 0
        %2461 = vmatprep.subr.bf16.mxu0 0
        %2462 = vmatpush1.bf16.msra.mxu0 0
        %2463 = vmatprep.subr.bf16.mxu0 0
        %2464 = vmatpush1.bf16.msra.mxu0 0
        %2465 = vmatprep.subr.bf16.mxu0 0
        %2466 = vmatpush1.bf16.msra.mxu0 0
        %2467 = vmatprep.subr.bf16.mxu0 0
        %2468 = vmatpush1.bf16.msra.mxu0 0
        %2469 = vmatprep.subr.bf16.mxu0 0
        %2470 = vmatpush1.bf16.msra.mxu0 0
        %2471 = vmatprep.mubr.bf16.mxu0 0
        %2472 = vmatmul.mubr.bf16.gmra.mrb[0].mxu0 %v2437
        %v2473 = vpop.f32.mrb[0].mxu0
        %v2474 = vadd.f32 0.0, %v2473
        %v2475 = vpop.f32.mrb[0].mxu0
        %v2476 = vpop.f32.mrb[0].mxu0
        %v2477 = vpop.f32.mrb[0].mxu0
        %2478 = vdwg.mxu0
        %v2479 = vadd.f32 %v2388, %v2474
        %2481 = vrot.lane.b32.xlu0 %v2479, 96
        %v2482 = vpop.permute.xlu0 %2481
        %v2484 = vmax.f32 %v2479, %v2482
        %v2485 = vld [vmem:[%s8] sm:$0x3]
        %vm2486 = vcmask 23552
        %v2488 = vsel %vm2486, %v2485, 0
        %v2491 = vsel %vm2203, %v2484, 0
        %2493 = vmatprep.subr.mxu0 0.0
        %2494 = vmatpush1.msra.mxu0 %v2491
        %2495 = vmatprep.subr.mxu0 0.0
        %2496 = vmatpush1.msra.mxu0 0.0
        %2497 = vmatprep.subr.mxu0 0.0
        %2498 = vmatpush1.msra.mxu0 0.0
        %2499 = vmatprep.subr.mxu0 0.0
        %2500 = vmatpush1.msra.mxu0 0.0
        %2501 = vmatprep.subr.mxu0 0.0
        %2502 = vmatpush1.msra.mxu0 0.0
        %2503 = vmatprep.subr.mxu0 0.0
        %2504 = vmatpush1.msra.mxu0 0.0
        %2505 = vmatprep.subr.mxu0 0.0
        %2506 = vmatpush1.msra.mxu0 0.0
        %2507 = vmatprep.subr.mxu0 0.0
        %2508 = vmatpush1.msra.mxu0 0.0
        %2509 = vmatprep.subr.mxu0 0.0
        %2510 = vmatpush1.msra.mxu0 0.0
        %2511 = vmatprep.subr.mxu0 0.0
        %2512 = vmatpush1.msra.mxu0 0.0
        %2513 = vmatprep.subr.mxu0 0.0
        %2514 = vmatpush1.msra.mxu0 0.0
        %2515 = vmatprep.subr.mxu0 0.0
        %2516 = vmatpush1.msra.mxu0 0.0
        %2517 = vmatprep.subr.mxu0 0.0
        %2518 = vmatpush1.msra.mxu0 0.0
        %2519 = vmatprep.subr.mxu0 0.0
        %2520 = vmatpush1.msra.mxu0 0.0
        %2521 = vmatprep.subr.mxu0 0.0
        %2522 = vmatpush1.msra.mxu0 0.0
        %2523 = vmatprep.subr.mxu0 0.0
        %2524 = vmatpush1.msra.mxu0 0.0
        %2525 = vmatprep.subr.mxu0 0.0
        %2526 = vmatpush1.msra.mxu0 0.0
        %2527 = vmatprep.subr.mxu0 0.0
        %2528 = vmatpush1.msra.mxu0 0.0
        %2529 = vmatprep.subr.mxu0 0.0
        %2530 = vmatpush1.msra.mxu0 0.0
        %2531 = vmatprep.subr.mxu0 0.0
        %2532 = vmatpush1.msra.mxu0 0.0
        %2533 = vmatprep.subr.mxu0 0.0
        %2534 = vmatpush1.msra.mxu0 0.0
        %2535 = vmatprep.subr.mxu0 0.0
        %2536 = vmatpush1.msra.mxu0 0.0
        %2537 = vmatprep.subr.mxu0 0.0
        %2538 = vmatpush1.msra.mxu0 0.0
        %2539 = vmatprep.subr.mxu0 0.0
        %2540 = vmatpush1.msra.mxu0 0.0
        %2541 = vmatprep.subr.mxu0 0.0
        %2542 = vmatpush1.msra.mxu0 0.0
        %2543 = vmatprep.subr.mxu0 0.0
        %2544 = vmatpush1.msra.mxu0 0.0
        %2545 = vmatprep.subr.mxu0 0.0
        %2546 = vmatpush1.msra.mxu0 0.0
        %2547 = vmatprep.subr.mxu0 0.0
        %2548 = vmatpush1.msra.mxu0 0.0
        %2549 = vmatprep.subr.mxu0 0.0
        %2550 = vmatpush1.msra.mxu0 0.0
        %2551 = vmatprep.subr.mxu0 0.0
        %2552 = vmatpush1.msra.mxu0 0.0
        %2553 = vmatprep.subr.mxu0 0.0
        %2554 = vmatpush1.msra.mxu0 0.0
        %2555 = vmatprep.subr.mxu0 0.0
        %2556 = vmatpush1.msra.mxu0 0.0
        %2557 = vmatprep.mubr.f32.mxu0 0.0
        %2558 = vmatmul.mubr.f32.gmra.mrb[0].mxu0 %v2488
        %v2559 = vpop.f32.mrb[0].mxu0
        %v2560 = vadd.f32 0.0, %v2559
        %v2561 = vpop.f32.mrb[0].mxu0
        %2562 = vdwg.mxu0
        %v2564 = vrot.slane %v2560, 1
        %v2566 = vmax.f32 %v2560, %v2564
        %v2567 = vld [vmem:[%s9] sm:$0x1]
        %v2568 = vadd.f32 %v2566, %v2567
        %v2569 = vmax.f32 %v2568, 0.0
        %v2570 = vpack.c.bf16 %v2569, %v2569
        %v2571 = vld [vmem:[%s10] sm:$0xf]
        %v2572 = vld [vmem:[%s10 + $0x4] sm:$0xf]
        %v2573 = vld [vmem:[%s10 + $0x8] sm:$0xf]
        %v2574 = vld [vmem:[%s10 + $0xc] sm:$0xf]
        %v2575 = vld [vmem:[%s11] sm:$0x1]
        %v2580 = vunpack.c.l.b16 %v2571
        %v2581 = vunpack.c.l.b16 %v2572
        %v2582 = vunpack.c.l.b16 %v2573
        %v2583 = vunpack.c.l.b16 %v2574
        %v2584 = vpack.c.b16 %v2581, %v2580
        %v2585 = vpack.c.b16 %v2583, %v2582
        %vm2588 = vcmask 261120
        %v2590 = vsel %vm2588, %v2570, 0
        %2592 = vmatprep.subr.bf16.mxu0 0
        %2593 = vmatpush1.bf16.msra.mxu0 %v2584
        %2594 = vmatprep.subr.bf16.mxu0 0
        %2595 = vmatpush1.bf16.msra.mxu0 %v2585
        %2596 = vmatprep.subr.bf16.mxu0 0
        %2597 = vmatpush1.bf16.msra.mxu0 0
        %2598 = vmatprep.subr.bf16.mxu0 0
        %2599 = vmatpush1.bf16.msra.mxu0 0
        %2600 = vmatprep.subr.bf16.mxu0 0
        %2601 = vmatpush1.bf16.msra.mxu0 0
        %2602 = vmatprep.subr.bf16.mxu0 0
        %2603 = vmatpush1.bf16.msra.mxu0 0
        %2604 = vmatprep.subr.bf16.mxu0 0
        %2605 = vmatpush1.bf16.msra.mxu0 0
        %2606 = vmatprep.subr.bf16.mxu0 0
        %2607 = vmatpush1.bf16.msra.mxu0 0
        %2608 = vmatprep.subr.bf16.mxu0 0
        %2609 = vmatpush1.bf16.msra.mxu0 0
        %2610 = vmatprep.subr.bf16.mxu0 0
        %2611 = vmatpush1.bf16.msra.mxu0 0
        %2612 = vmatprep.subr.bf16.mxu0 0
        %2613 = vmatpush1.bf16.msra.mxu0 0
        %2614 = vmatprep.subr.bf16.mxu0 0
        %2615 = vmatpush1.bf16.msra.mxu0 0
        %2616 = vmatprep.subr.bf16.mxu0 0
        %2617 = vmatpush1.bf16.msra.mxu0 0
        %2618 = vmatprep.subr.bf16.mxu0 0
        %2619 = vmatpush1.bf16.msra.mxu0 0
        %2620 = vmatprep.subr.bf16.mxu0 0
        %2621 = vmatpush1.bf16.msra.mxu0 0
        %2622 = vmatprep.subr.bf16.mxu0 0
        %2623 = vmatpush1.bf16.msra.mxu0 0
        %2624 = vmatprep.mubr.bf16.mxu0 0
        %2625 = vmatmul.mubr.bf16.gmra.mrb[0].mxu0 %v2590
        %v2626 = vpop.f32.mrb[0].mxu0
        %v2627 = vadd.f32 %v2575, %v2626
        %v2628 = vpop.f32.mrb[0].mxu0
        %v2629 = vpop.f32.mrb[0].mxu0
        %v2630 = vpop.f32.mrb[0].mxu0
        %2631 = vdwg.mxu0
        %v2632 = vmax.f32 %v2627, 0.0
        %v2633 = vpack.c.bf16 %v2632, %v2632
        %v2634 = vld [vmem:[%s12] sm:$0xf]
        %v2635 = vld [vmem:[%s12 + $0x4] sm:$0xf]
        %v2636 = vld [vmem:[%s12 + $0x8] sm:$0xf]
        %v2637 = vld [vmem:[%s12 + $0xc] sm:$0xf]
        %v2638 = vld [vmem:[%s13] sm:$0x1]
        %v2643 = vunpack.c.l.b16 %v2634
        %v2644 = vunpack.c.l.b16 %v2635
        %v2645 = vunpack.c.l.b16 %v2636
        %v2646 = vunpack.c.l.b16 %v2637
        %v2647 = vpack.c.b16 %v2644, %v2643
        %v2648 = vpack.c.b16 %v2646, %v2645
        %v2652 = vsel %vm2588, %v2633, 0
        %2654 = vmatprep.subr.bf16.mxu0 0
        %2655 = vmatpush1.bf16.msra.mxu0 %v2647
        %2656 = vmatprep.subr.bf16.mxu0 0
        %2657 = vmatpush1.bf16.msra.mxu0 %v2648
        %2658 = vmatprep.subr.bf16.mxu0 0
        %2659 = vmatpush1.bf16.msra.mxu0 0
        %2660 = vmatprep.subr.bf16.mxu0 0
        %2661 = vmatpush1.bf16.msra.mxu0 0
        %2662 = vmatprep.subr.bf16.mxu0 0
        %2663 = vmatpush1.bf16.msra.mxu0 0
        %2664 = vmatprep.subr.bf16.mxu0 0
        %2665 = vmatpush1.bf16.msra.mxu0 0
        %2666 = vmatprep.subr.bf16.mxu0 0
        %2667 = vmatpush1.bf16.msra.mxu0 0
        %2668 = vmatprep.subr.bf16.mxu0 0
        %2669 = vmatpush1.bf16.msra.mxu0 0
        %2670 = vmatprep.subr.bf16.mxu0 0
        %2671 = vmatpush1.bf16.msra.mxu0 0
        %2672 = vmatprep.subr.bf16.mxu0 0
        %2673 = vmatpush1.bf16.msra.mxu0 0
        %2674 = vmatprep.subr.bf16.mxu0 0
        %2675 = vmatpush1.bf16.msra.mxu0 0
        %2676 = vmatprep.subr.bf16.mxu0 0
        %2677 = vmatpush1.bf16.msra.mxu0 0
        %2678 = vmatprep.subr.bf16.mxu0 0
        %2679 = vmatpush1.bf16.msra.mxu0 0
        %2680 = vmatprep.subr.bf16.mxu0 0
        %2681 = vmatpush1.bf16.msra.mxu0 0
        %2682 = vmatprep.subr.bf16.mxu0 0
        %2683 = vmatpush1.bf16.msra.mxu0 0
        %2684 = vmatprep.subr.bf16.mxu0 0
        %2685 = vmatpush1.bf16.msra.mxu0 0
        %2686 = vmatprep.mubr.bf16.mxu0 0
        %2687 = vmatmul.mubr.bf16.gmra.mrb[0].mxu0 %v2652
        %v2688 = vpop.f32.mrb[0].mxu0
        %v2689 = vadd.f32 %v2638, %v2688
        %v2690 = vpop.f32.mrb[0].mxu0
        %v2691 = vpop.f32.mrb[0].mxu0
        %v2692 = vpop.f32.mrb[0].mxu0
        %2693 = vdwg.mxu0
        %v2694 = vmax.f32 %v2689, 0.0
        %v2695 = vpack.c.bf16 %v2694, %v2694
        %v2696 = vld [vmem:[%s14] sm:$0xf]
        %v2697 = vld [vmem:[%s14 + $0x4] sm:$0xf]
        %v2698 = vld [vmem:[%s15] sm:$0x1]
        %v2701 = vunpack.c.l.b16 %v2696
        %v2702 = vunpack.c.l.b16 %v2697
        %v2703 = vpack.c.b16 %v2702, %v2701
        %v2706 = vsel %vm1272, %v2695, 0
        %2708 = vmatprep.subr.bf16.mxu0 0
        %2709 = vmatpush1.bf16.msra.mxu0 %v2703
        %2710 = vmatprep.subr.bf16.mxu0 0
        %2711 = vmatpush1.bf16.msra.mxu0 0
        %2712 = vmatprep.subr.bf16.mxu0 0
        %2713 = vmatpush1.bf16.msra.mxu0 0
        %2714 = vmatprep.subr.bf16.mxu0 0
        %2715 = vmatpush1.bf16.msra.mxu0 0
        %2716 = vmatprep.subr.bf16.mxu0 0
        %2717 = vmatpush1.bf16.msra.mxu0 0
        %2718 = vmatprep.subr.bf16.mxu0 0
        %2719 = vmatpush1.bf16.msra.mxu0 0
        %2720 = vmatprep.subr.bf16.mxu0 0
        %2721 = vmatpush1.bf16.msra.mxu0 0
        %2722 = vmatprep.subr.bf16.mxu0 0
        %2723 = vmatpush1.bf16.msra.mxu0 0
        %2724 = vmatprep.subr.bf16.mxu0 0
        %2725 = vmatpush1.bf16.msra.mxu0 0
        %2726 = vmatprep.subr.bf16.mxu0 0
        %2727 = vmatpush1.bf16.msra.mxu0 0
        %2728 = vmatprep.subr.bf16.mxu0 0
        %2729 = vmatpush1.bf16.msra.mxu0 0
        %2730 = vmatprep.subr.bf16.mxu0 0
        %2731 = vmatpush1.bf16.msra.mxu0 0
        %2732 = vmatprep.subr.bf16.mxu0 0
        %2733 = vmatpush1.bf16.msra.mxu0 0
        %2734 = vmatprep.subr.bf16.mxu0 0
        %2735 = vmatpush1.bf16.msra.mxu0 0
        %2736 = vmatprep.subr.bf16.mxu0 0
        %2737 = vmatpush1.bf16.msra.mxu0 0
        %2738 = vmatprep.subr.bf16.mxu0 0
        %2739 = vmatpush1.bf16.msra.mxu0 0
        %2740 = vmatprep.mubr.bf16.mxu0 0
        %2741 = vmatmul.mubr.bf16.gmra.mrb[0].mxu0 %v2706
        %v2742 = vpop.f32.mrb[0].mxu0
        %v2743 = vadd.f32 %v2698, %v2742
        %v2744 = vpop.f32.mrb[0].mxu0
        %v2745 = vpop.f32.mrb[0].mxu0
        %v2746 = vpop.f32.mrb[0].mxu0
        %2747 = vdwg.mxu0
        %vm2748 = vcmask 8192
        %2749 = vst.msk [vmem:[%s513] sm:$0x1] %vm2748, %v2743
        %s2750 = sand.u32 %s379, 1
        %s2751 = scalar_lea.sflag [#allocation3], %s2750
        %s2752 = sand.u32 %s379, 1
        %s2753 = scalar_lea.vmem [#allocation2], %s2752
        // Predicated region
        $region85: #{driving_net_forward.1} parent=83 // pred_check
          %p2754 = pneg %p389
        $region86: #{driving_net_forward.1} parent=83 // pred_check_branch
          %2756 = sbr.rel (%p2754) target = $region88
        $region87: #{driving_net_forward.1} parent=83 // pred_region
          %s2758 = ssub.s32 16, 16
          %2759 = vsyncadd %s2751, %s2758
          %s2760 = smul.addr %s30, 16
          %s2761 = scalar_lea.hbm %s16, %s2760
          %s2763 = sshll.u32 %s2753, 4
          %s2764 = int_to_ptr.vmem [resolvable:$true] %s2763
          %2766 = dma.vmem_to_hbm [thread:$0]  %s2764, 16, %s2761, %s2751
        $region88: #{driving_net_forward.1} parent=83 // pred_fallthru
          _
      $region84: #{driving_net_forward.1} parent=5 // pred_fallthru
        _
      %p2767 = scmp.le.s32.totalorder 2, %s25
      // Predicated region
      $region89: #{driving_net_forward.1} parent=5 // pred_check
        %p2768 = pneg %p2767
      $region90: #{driving_net_forward.1} parent=5 // pred_check_branch
        %2770 = sbr.rel (%p2768) target = $region92
      $region91: #{driving_net_forward.1} parent=5 // pred_region
        %s2771 = ssub.s32 %s25, 2
        // Predicated region
        $region93: #{driving_net_forward.1} parent=91 // pred_check
          %p2772 = pneg %p395
        $region94: #{driving_net_forward.1} parent=91 // pred_check_branch
          %2774 = sbr.rel (%p2772) target = $region96
        $region95: #{driving_net_forward.1} parent=91 // pred_region
          %s2775 = sand.u32 %s380, 1
          %s2776 = scalar_lea.sflag [#allocation3], %s2775
          %s2777 = sand.u32 %s380, 1
          %s2778 = scalar_lea.vmem [#allocation2], %s2777
          %2779 = dma.done %s2776, 16
        $region96: #{driving_net_forward.1} parent=91 // pred_fallthru
          _
      $region92: #{driving_net_forward.1} parent=5 // pred_fallthru
        _
    $region6: #{driving_net_forward.1} parent=1 // loop_footer
      %s29 = sadd.s32 1, %s25
    $region7: #{driving_net_forward.1} parent=1 // loop_footer_branch
      %24 = sbr.rel target = $region3
    $region8: #{driving_net_forward.1} parent=1 // loop_exit
      _
    %2780 = vsyncpa [#allocation3], 1
    %s2781 = scalar_lea.sflag [#allocation3], 1
    %2782 = vsyncpa %s2781, 1

</llo_original>
